<compile_context>
chip_gen: v6e
topology: v6e:2x2x1
jax: 0.10.0
libtpu: 0.0.40
codegen_flags: <defaults>
</compile_context>

<pallas_src>
import functools

import jax
import jax.numpy as jnp
from jax import lax
from jax.experimental import pallas as pl
from jax.experimental.pallas import tpu as pltpu


# ---------------------------------------------------------------------------
# Fused dense-block kernel (all layers, one batch element per grid step)
# ---------------------------------------------------------------------------

def _dense_block_kernel(*refs, num_layers, H, W, G, in_planes, growth):
    """refs = (x, [wa, ba, wb, bb, wc, bc] * num_layers, out, buf_b, buf_c).

    x_ref   : (in_planes, H*W)        block input (channel-major, lanes = pixels)
    wa      : (2*inter, cin_l)        merged cb1_a|cb2_a 1x1 weights (BN folded)
    ba      : (2*inter, 1)            merged folded bias
    wb      : (growth, 9*2*inter)     cb1_b|cb2_b 3x3 weights, tap-stacked, block-structured
    bb      : (growth, 1)
    wc      : (growth, 9*growth)      rows 0:g2 = identity pass of cb1_b output (center tap),
                                      rows g2:growth = cb2_c 3x3 weights (tap-stacked)
    bc      : (growth, 1)
    out_ref : (in_planes + growth*num_layers, H*W)   growing concat feature map
    buf_b   : (9*2*inter, H*W + 2G)   im2col scatter buffer for the b-convs
    buf_c   : (9*growth,  H*W + 2G)   im2col scatter buffer for the c-conv
    """
    HW = H * W
    f32 = jnp.float32

    x_ref = refs[0]
    layer_refs = refs[1:1 + 6 * num_layers]
    out_ref = refs[1 + 6 * num_layers]
    bufb_ref = refs[2 + 6 * num_layers]
    bufc_ref = refs[3 + 6 * num_layers]

    # Column masks over the *source* column j of the flattened image (hoisted):
    #   dx == 0 taps must not see the last column of the previous image row,
    #   dx == 2 taps must not see the first column of the next image row.
    colj = lax.broadcasted_iota(jnp.int32, (1, HW), 1) % W
    mask_dx0 = colj != (W - 1)
    mask_dx2 = colj != 0

    # Zero (once per grid step) the halo lanes inside the conv read window
    # [G, G+HW) that the tap scatter never writes.  Tap offsets are fixed per
    # row-block, so these zeros stay valid across every layer.
    pad = W + 1
    for buf in (bufb_ref, bufc_ref):
        rows = buf.shape[0]
        buf[:, G:G + pad] = jnp.zeros((rows, pad), f32)
        buf[:, G + HW - pad:G + HW] = jnp.zeros((rows, pad), f32)

    def scatter_taps(buf, act):
        """im2col scatter: write `act` into all 9 tap row-blocks of `buf` at lane
        offset G - ((dy-1)*W + (dx-1)); dx==0 / dx==2 copies are pre-masked so the
        flattened-shift trick never wraps across image columns."""
        c = act.shape[0]
        a0 = jnp.where(mask_dx0, act, 0.0)
        a2 = jnp.where(mask_dx2, act, 0.0)
        for dy in range(3):
            for dx in range(3):
                tap = dy * 3 + dx
                off = (dy - 1) * W + (dx - 1)
                v = a0 if dx == 0 else (a2 if dx == 2 else act)
                buf[tap * c:(tap + 1) * c, G - off:G - off + HW] = v

    # concat part 1: x passthrough, written exactly once for the whole block.
    out_ref[0:in_planes, :] = x_ref[...]

    for l in range(num_layers):
        wa, ba, wb, bb, wc, bc = layer_refs[6 * l:6 * l + 6]
        cin = in_planes + growth * l

        # Merged cb1_a + cb2_a 1x1 convs (BN folded) + ReLU: one matmul reading
        # the growing feature map straight from the output VMEM block.
        t = jnp.dot(wa[...], out_ref[0:cin, :], preferred_element_type=f32)
        t = jnp.maximum(t + ba[...], 0.0)                      # (2*inter, HW)

        # Merged cb1_b + cb2_b 3x3 convs: scatter + ONE K = 9*2*inter dot
        # (lane-aligned RHS slice -> streamed loads, accumulation stays on MXU).
        scatter_taps(bufb_ref, t)
        yb = jnp.dot(wb[...], bufb_ref[:, G:G + HW], preferred_element_type=f32)
        yb = jnp.maximum(yb + bb[...], 0.0)                    # (growth, HW) = [y1b ; y2b]

        # cb2_c 3x3 conv + y1b passthrough in ONE K = 9*growth dot: scatter the
        # full yb (keeps stores sublane-group aligned); wc rows 0:g2 are an exact
        # identity read of y1b at the center tap (ReLU is idempotent on y1b >= 0),
        # so the dot directly produces the [cb1_b ; cb2_c] growth slab.
        scatter_taps(bufc_ref, yb)
        ynew = jnp.dot(wc[...], bufc_ref[:, G:G + HW], preferred_element_type=f32)
        ynew = jnp.maximum(ynew + bc[...], 0.0)                # (growth, HW)

        # concat parts 2+3: a single full-sublane-group, lane-dense store.
        out_ref[cin:cin + growth, :] = ynew


@jax.jit
def dense_block_apply(x, layer_params):
    """x: (N, in_planes, H, W) -> (N, in_planes + growth*num_layers, H, W)."""
    N, in_planes, H, W = x.shape
    HW = H * W
    num_layers = len(layer_params)
    growth = layer_params[0]["bb"].shape[0]          # 2 * (growth // 2)
    inter2 = layer_params[0]["wa"].shape[0]
    c_final = in_planes + growth * num_layers
    G = max(128, ((W + 1 + 127) // 128) * 128)       # lane-aligned halo width (>= W+1)
    L = HW + 2 * G

    kernel = functools.partial(
        _dense_block_kernel, num_layers=num_layers, H=H, W=W, G=G,
        in_planes=in_planes, growth=growth)

    weight_args = []
    in_specs = [pl.BlockSpec((None, in_planes, HW), lambda n: (n, 0, 0))]
    for kp in layer_params:
        for name in ("wa", "ba", "wb", "bb", "wc", "bc"):
            arr = kp[name]
            weight_args.append(arr)
            in_specs.append(pl.BlockSpec(arr.shape, lambda n: (0, 0)))

    # TODO(synk): for much larger H*W / channel counts, tile H*W in lane-aligned
    # chunks with a W-wide halo and budget buf_b/buf_c for v7x's 64 MiB VMEM
    # (raise vmem_limit_bytes on v5e if needed); also consider bf16 MXU inputs on
    # v6e/v7x with f32 accumulation (loosens the 1e-3 reference tolerance).
    out = pl.pallas_call(
        kernel,
        out_shape=jax.ShapeDtypeStruct((N, c_final, HW), jnp.float32),
        grid=(N,),
        in_specs=in_specs,
        out_specs=pl.BlockSpec((None, c_final, HW), lambda n: (n, 0, 0)),
        scratch_shapes=[
            pltpu.VMEM((9 * inter2, L), jnp.float32),
            pltpu.VMEM((9 * growth, L), jnp.float32),
        ],
        compiler_params=pltpu.CompilerParams(
            dimension_semantics=("parallel",)),
    )(x.reshape(N, in_planes, HW), *weight_args)
    return out.reshape(N, c_final, H, W)


# ---------------------------------------------------------------------------
# Parameter construction (deterministic, synthetic), BN folding, kernel prep
# ---------------------------------------------------------------------------

def _fold_bn(key, cout, eps=1e-5):
    kg, kb, km, kv = jax.random.split(key, 4)
    gamma = 1.0 + 0.1 * jax.random.normal(kg, (cout,), jnp.float32)
    beta = 0.1 * jax.random.normal(kb, (cout,), jnp.float32)
    mean = 0.1 * jax.random.normal(km, (cout,), jnp.float32)
    var = jnp.abs(1.0 + 0.1 * jax.random.normal(kv, (cout,), jnp.float32))
    scale = gamma * lax.rsqrt(var + eps)
    bias = beta - mean * scale
    return scale, bias


def make_conv_block_params(key, cin, cout, ksize):
    kw, kbn = jax.random.split(key)
    w = 0.2 * jax.random.normal(kw, (cout, cin, ksize, ksize), jnp.float32)  # OIHW
    scale, bias = _fold_bn(kbn, cout)
    return {"w": w, "scale": scale, "bias": bias}


def make_dense_layer_params(key, in_planes, growth_rate, bottleneck_width):
    inter = bottleneck_width * growth_rate // 2
    g2 = growth_rate // 2
    keys = jax.random.split(key, 5)
    return {
        "cb1_a": make_conv_block_params(keys[0], in_planes, inter, 1),
        "cb1_b": make_conv_block_params(keys[1], inter, g2, 3),
        "cb2_a": make_conv_block_params(keys[2], in_planes, inter, 1),
        "cb2_b": make_conv_block_params(keys[3], inter, g2, 3),
        "cb2_c": make_conv_block_params(keys[4], g2, g2, 3),
    }


def make_dense_block_params(key, in_planes, no_dense_layers, growth_rate,
                            bottleneck_width):
    keys = jax.random.split(key, no_dense_layers)
    return [
        make_dense_layer_params(keys[i], in_planes + growth_rate * i,
                                growth_rate, bottleneck_width)
        for i in range(no_dense_layers)
    ]


def prepare_layer_params(p):
    """Fold BN scale into conv weights and build the merged / tap-stacked layouts."""
    def fold(cb):
        return cb["w"] * cb["scale"][:, None, None, None], cb["bias"]

    w1a, b1a = fold(p["cb1_a"])
    w2a, b2a = fold(p["cb2_a"])
    w1b, b1b = fold(p["cb1_b"])
    w2b, b2b = fold(p["cb2_b"])
    w2c, b2c = fold(p["cb2_c"])

    inter = w1a.shape[0]
    inter2 = 2 * inter
    g2 = w1b.shape[0]
    growth = 2 * g2

    # Merged 1x1 weights / bias.
    wa = jnp.concatenate([w1a[:, :, 0, 0], w2a[:, :, 0, 0]], axis=0)   # (2*inter, cin)
    ba = jnp.concatenate([b1a, b2a], axis=0)[:, None]

    # Merged cb1_b|cb2_b weights: (growth, 9*inter2), block-structured per tap
    # (rows 0:g2 read the first `inter` channels of t, rows g2:growth the rest).
    wb = jnp.zeros((growth, 9 * inter2), jnp.float32)
    # cb2_c weights + identity passthrough of y1b: (growth, 9*growth).
    wc = jnp.zeros((growth, 9 * growth), jnp.float32)
    wc = wc.at[0:g2, 4 * growth:4 * growth + g2].set(jnp.eye(g2, dtype=jnp.float32))
    for dy in range(3):
        for dx in range(3):
            tap = dy * 3 + dx
            wb = wb.at[0:g2, tap * inter2:tap * inter2 + inter].set(w1b[:, :, dy, dx])
            wb = wb.at[g2:growth, tap * inter2 + inter:(tap + 1) * inter2].set(
                w2b[:, :, dy, dx])
            wc = wc.at[g2:growth, tap * growth + g2:(tap + 1) * growth].set(
                w2c[:, :, dy, dx])
    bb = jnp.concatenate([b1b, b2b], axis=0)[:, None]
    bc = jnp.concatenate([jnp.zeros((g2,), jnp.float32), b2c], axis=0)[:, None]
    return {"wa": wa, "ba": ba, "wb": wb, "bb": bb, "wc": wc, "bc": bc}


# ---------------------------------------------------------------------------
# Pure-JAX reference (lax.conv, un-folded BN affine) for verification
# ---------------------------------------------------------------------------

def _ref_conv_bn_relu(x, cb, padding):
    y = lax.conv_general_dilated(
        x, cb["w"], (1, 1), padding,
        dimension_numbers=("NCHW", "OIHW", "NCHW"))
    s = cb["scale"][None, :, None, None]
    b = cb["bias"][None, :, None, None]
    return jnp.maximum(y * s + b, 0.0)


def _ref_dense_block(x, params):
    for p in params:
        a1 = _ref_conv_bn_relu(x, p["cb1_a"], "VALID")
        b1 = _ref_conv_bn_relu(a1, p["cb1_b"], "SAME")
        a2 = _ref_conv_bn_relu(x, p["cb2_a"], "VALID")
        b2 = _ref_conv_bn_relu(a2, p["cb2_b"], "SAME")
        c2 = _ref_conv_bn_relu(b2, p["cb2_c"], "SAME")
        x = jnp.concatenate([x, b1, c2], axis=1)
    return x


if __name__ == "__main__":
    key = jax.random.PRNGKey(0)
    k_x, k_p = jax.random.split(key)

    # DenseBlock(in_planes=8, no_dense_layers=2, growth_rate=8,
    #            bottleneck_width=2); input NCHW = (2, 8, 16, 16).
    N, H, W = 2, 16, 16
    in_planes, no_dense_layers, growth_rate, bottleneck_width = 8, 2, 8, 2

    x = jax.random.normal(k_x, (N, in_planes, H, W), jnp.float32)
    raw_params = make_dense_block_params(k_p, in_planes, no_dense_layers,
                                         growth_rate, bottleneck_width)
    kernel_params = [prepare_layer_params(p) for p in raw_params]

    out = jax.block_until_ready(dense_block_apply(x, kernel_params))

    expected_c = in_planes + growth_rate * no_dense_layers
    assert out.shape == (N, expected_c, H, W), out.shape

    ref = jax.block_until_ready(_ref_dense_block(x, raw_params))
    max_err = float(jnp.max(jnp.abs(out - ref)))
    assert jnp.allclose(out, ref, atol=1e-3, rtol=1e-3), max_err

    print("KERNEL_OK")
</pallas_src>

<mosaic_0001>
module attributes {stable_mosaic.version = 11 : i64} {
  func.func @_dense_block_kernel(%arg0: i32, %arg1: memref<1x8x256xf32, #tpu.memory_space<vmem>>, %arg2: memref<16x8xf32, #tpu.memory_space<vmem>>, %arg3: memref<16x1xf32, #tpu.memory_space<vmem>>, %arg4: memref<8x144xf32, #tpu.memory_space<vmem>>, %arg5: memref<8x1xf32, #tpu.memory_space<vmem>>, %arg6: memref<8x72xf32, #tpu.memory_space<vmem>>, %arg7: memref<8x1xf32, #tpu.memory_space<vmem>>, %arg8: memref<16x16xf32, #tpu.memory_space<vmem>>, %arg9: memref<16x1xf32, #tpu.memory_space<vmem>>, %arg10: memref<8x144xf32, #tpu.memory_space<vmem>>, %arg11: memref<8x1xf32, #tpu.memory_space<vmem>>, %arg12: memref<8x72xf32, #tpu.memory_space<vmem>>, %arg13: memref<8x1xf32, #tpu.memory_space<vmem>>, %arg14: memref<1x24x256xf32, #tpu.memory_space<vmem>>, %arg15: memref<144x512xf32, #tpu.memory_space<vmem>>, %arg16: memref<72x512xf32, #tpu.memory_space<vmem>>) attributes {dimension_semantics = [#tpu.dimension_semantics<parallel>], iteration_bounds = array<i64: 2>, scalar_prefetch = 0 : i64, scratch_operands = 2 : i64, tpu.core_type = #tpu.core_type<tc>, window_params = [{transform_indices = @transform_0, window_bounds = array<i64: 1, 8, 256>}, {pipeline_mode = #tpu.pipeline_mode<synchronous>, transform_indices = @transform_1, window_bounds = array<i64: 16, 8>}, {pipeline_mode = #tpu.pipeline_mode<synchronous>, transform_indices = @transform_2, window_bounds = array<i64: 16, 1>}, {pipeline_mode = #tpu.pipeline_mode<synchronous>, transform_indices = @transform_3, window_bounds = array<i64: 8, 144>}, {pipeline_mode = #tpu.pipeline_mode<synchronous>, transform_indices = @transform_4, window_bounds = array<i64: 8, 1>}, {pipeline_mode = #tpu.pipeline_mode<synchronous>, transform_indices = @transform_5, window_bounds = array<i64: 8, 72>}, {pipeline_mode = #tpu.pipeline_mode<synchronous>, transform_indices = @transform_6, window_bounds = array<i64: 8, 1>}, {pipeline_mode = #tpu.pipeline_mode<synchronous>, transform_indices = @transform_7, window_bounds = array<i64: 16, 16>}, {pipeline_mode = #tpu.pipeline_mode<synchronous>, transform_indices = @transform_8, window_bounds = array<i64: 16, 1>}, {pipeline_mode = #tpu.pipeline_mode<synchronous>, transform_indices = @transform_9, window_bounds = array<i64: 8, 144>}, {pipeline_mode = #tpu.pipeline_mode<synchronous>, transform_indices = @transform_10, window_bounds = array<i64: 8, 1>}, {pipeline_mode = #tpu.pipeline_mode<synchronous>, transform_indices = @transform_11, window_bounds = array<i64: 8, 72>}, {pipeline_mode = #tpu.pipeline_mode<synchronous>, transform_indices = @transform_12, window_bounds = array<i64: 8, 1>}, {transform_indices = @transform_13, window_bounds = array<i64: 1, 24, 256>}]} {
    %0 = tpu.iota {dimensions = array<i32: 1>} : vector<1x256xi32>
    %c16_i32 = arith.constant 16 : i32
    %c0_i32 = arith.constant 0 : i32
    %1 = arith.cmpi eq, %c16_i32, %c0_i32 : i32
    %c1_i32 = arith.constant 1 : i32
    %2 = arith.select %1, %c1_i32, %c16_i32 : i32
    %3 = vector.broadcast %2 : i32 to vector<1x256xi32>
    %4 = arith.remsi %0, %3 : vector<1x256xi32>
    %c0_i32_0 = arith.constant 0 : i32
    %5 = vector.broadcast %c0_i32_0 : i32 to vector<1x256xi32>
    %6 = arith.cmpi ne, %4, %5 : vector<1x256xi32>
    %c0_i32_1 = arith.constant 0 : i32
    %7 = vector.broadcast %c0_i32_1 : i32 to vector<1x256xi32>
    %8 = arith.cmpi slt, %4, %7 : vector<1x256xi32>
    %c0_i32_2 = arith.constant 0 : i32
    %9 = arith.cmpi slt, %2, %c0_i32_2 : i32
    %10 = vector.broadcast %9 : i1 to vector<1x256xi1>
    %11 = vector.broadcast %10 : vector<1x256xi1> to vector<1x256xi1>
    %12 = arith.xori %8, %11 : vector<1x256xi1>
    %13 = arith.andi %12, %6 : vector<1x256xi1>
    %14 = vector.broadcast %2 : i32 to vector<1x256xi32>
    %15 = arith.addi %4, %14 : vector<1x256xi32>
    %16 = arith.select %13, %15, %4 : vector<1x256xi1>, vector<1x256xi32>
    %c15_i32 = arith.constant 15 : i32
    %17 = vector.broadcast %c15_i32 : i32 to vector<1x256xi32>
    %18 = arith.cmpi ne, %16, %17 : vector<1x256xi32>
    %c0_i32_3 = arith.constant 0 : i32
    %19 = vector.broadcast %c0_i32_3 : i32 to vector<1x256xi32>
    %20 = arith.cmpi ne, %16, %19 : vector<1x256xi32>
    %cst = arith.constant 0.000000e+00 : f32
    %21 = vector.broadcast %cst : f32 to vector<144x17xf32>
    %c0 = arith.constant 0 : index
    %c128 = arith.constant 128 : index
    %22 = vector.load %arg15[%c0, %c128] : memref<144x512xf32, #tpu.memory_space<vmem>>, vector<144x17xf32>
    tpu.vector_store %arg15[%c0, %c128], %21 {strides = array<i32>} : memref<144x512xf32, #tpu.memory_space<vmem>>, vector<144x17xf32>,
    %cst_4 = arith.constant 0.000000e+00 : f32
    %23 = vector.broadcast %cst_4 : f32 to vector<144x17xf32>
    %c0_5 = arith.constant 0 : index
    %c367 = arith.constant 367 : index
    %24 = vector.load %arg15[%c0_5, %c367] : memref<144x512xf32, #tpu.memory_space<vmem>>, vector<144x17xf32>
    tpu.vector_store %arg15[%c0_5, %c367], %23 {strides = array<i32>} : memref<144x512xf32, #tpu.memory_space<vmem>>, vector<144x17xf32>,
    %cst_6 = arith.constant 0.000000e+00 : f32
    %25 = vector.broadcast %cst_6 : f32 to vector<72x17xf32>
    %c0_7 = arith.constant 0 : index
    %c128_8 = arith.constant 128 : index
    %26 = vector.load %arg16[%c0_7, %c128_8] : memref<72x512xf32, #tpu.memory_space<vmem>>, vector<72x17xf32>
    tpu.vector_store %arg16[%c0_7, %c128_8], %25 {strides = array<i32>} : memref<72x512xf32, #tpu.memory_space<vmem>>, vector<72x17xf32>,
    %cst_9 = arith.constant 0.000000e+00 : f32
    %27 = vector.broadcast %cst_9 : f32 to vector<72x17xf32>
    %c0_10 = arith.constant 0 : index
    %c367_11 = arith.constant 367 : index
    %28 = vector.load %arg16[%c0_10, %c367_11] : memref<72x512xf32, #tpu.memory_space<vmem>>, vector<72x17xf32>
    tpu.vector_store %arg16[%c0_10, %c367_11], %27 {strides = array<i32>} : memref<72x512xf32, #tpu.memory_space<vmem>>, vector<72x17xf32>,
    %c0_12 = arith.constant 0 : index
    %c0_13 = arith.constant 0 : index
    %c0_14 = arith.constant 0 : index
    %29 = vector.load %arg1[%c0_12, %c0_13, %c0_14] : memref<1x8x256xf32, #tpu.memory_space<vmem>>, vector<1x8x256xf32>
    %30 = vector.shape_cast %29 : vector<1x8x256xf32> to vector<8x256xf32>
    %c0_15 = arith.constant 0 : index
    %c0_16 = arith.constant 0 : index
    %c0_17 = arith.constant 0 : index
    %31 = vector.load %arg14[%c0_15, %c0_16, %c0_17] : memref<1x24x256xf32, #tpu.memory_space<vmem>>, vector<1x8x256xf32>
    %32 = vector.shape_cast %31 : vector<1x8x256xf32> to vector<8x256xf32>
    %33 = vector.shape_cast %30 : vector<8x256xf32> to vector<1x8x256xf32>
    tpu.vector_store %arg14[%c0_15, %c0_16, %c0_17], %33 {strides = array<i32>} : memref<1x24x256xf32, #tpu.memory_space<vmem>>, vector<1x8x256xf32>,
    %c0_18 = arith.constant 0 : index
    %c0_19 = arith.constant 0 : index
    %34 = vector.load %arg2[%c0_18, %c0_19] : memref<16x8xf32, #tpu.memory_space<vmem>>, vector<16x8xf32>
    %c0_20 = arith.constant 0 : index
    %c0_21 = arith.constant 0 : index
    %c0_22 = arith.constant 0 : index
    %35 = vector.load %arg14[%c0_20, %c0_21, %c0_22] : memref<1x24x256xf32, #tpu.memory_space<vmem>>, vector<1x8x256xf32>
    %36 = vector.shape_cast %35 : vector<1x8x256xf32> to vector<8x256xf32>
    %cst_23 = arith.constant dense<0.000000e+00> : vector<16x256xf32>
    %37 = tpu.matmul %34, %36, %cst_23 {dimension_numbers = #tpu.dot_dimension_numbers<[1], [0], [0], [1], [0, 0, 1, 1], [], []>} : vector<16x8xf32>, vector<8x256xf32>, vector<16x256xf32> -> vector<16x256xf32>
    %c0_24 = arith.constant 0 : index
    %c0_25 = arith.constant 0 : index
    %38 = vector.load %arg3[%c0_24, %c0_25] : memref<16x1xf32, #tpu.memory_space<vmem>>, vector<16x1xf32>
    %39 = vector.broadcast %38 : vector<16x1xf32> to vector<16x256xf32>
    %40 = arith.addf %37, %39 : vector<16x256xf32>
    %cst_26 = arith.constant 0.000000e+00 : f32
    %41 = vector.broadcast %cst_26 : f32 to vector<16x256xf32>
    %42 = arith.maximumf %40, %41 : vector<16x256xf32>
    %cst_27 = arith.constant 0.000000e+00 : f32
    %43 = vector.shape_cast %18 : vector<1x256xi1> to vector<1x256xi1>
    %44 = vector.broadcast %43 : vector<1x256xi1> to vector<16x256xi1>
    %45 = vector.broadcast %cst_27 : f32 to vector<16x256xf32>
    %46 = arith.select %44, %42, %45 : vector<16x256xi1>, vector<16x256xf32>
    %cst_28 = arith.constant 0.000000e+00 : f32
    %47 = vector.shape_cast %20 : vector<1x256xi1> to vector<1x256xi1>
    %48 = vector.broadcast %47 : vector<1x256xi1> to vector<16x256xi1>
    %49 = vector.broadcast %cst_28 : f32 to vector<16x256xf32>
    %50 = arith.select %48, %42, %49 : vector<16x256xi1>, vector<16x256xf32>
    %c0_29 = arith.constant 0 : index
    %c145 = arith.constant 145 : index
    %51 = vector.load %arg15[%c0_29, %c145] : memref<144x512xf32, #tpu.memory_space<vmem>>, vector<16x256xf32>
    tpu.vector_store %arg15[%c0_29, %c145], %46 {strides = array<i32>} : memref<144x512xf32, #tpu.memory_space<vmem>>, vector<16x256xf32>,
    %c16 = arith.constant 16 : index
    %c144 = arith.constant 144 : index
    %52 = vector.load %arg15[%c16, %c144] : memref<144x512xf32, #tpu.memory_space<vmem>>, vector<16x256xf32>
    tpu.vector_store %arg15[%c16, %c144], %42 {strides = array<i32>} : memref<144x512xf32, #tpu.memory_space<vmem>>, vector<16x256xf32>,
    %c32 = arith.constant 32 : index
    %c143 = arith.constant 143 : index
    %53 = vector.load %arg15[%c32, %c143] : memref<144x512xf32, #tpu.memory_space<vmem>>, vector<16x256xf32>
    tpu.vector_store %arg15[%c32, %c143], %50 {strides = array<i32>} : memref<144x512xf32, #tpu.memory_space<vmem>>, vector<16x256xf32>,
    %c48 = arith.constant 48 : index
    %c129 = arith.constant 129 : index
    %54 = vector.load %arg15[%c48, %c129] : memref<144x512xf32, #tpu.memory_space<vmem>>, vector<16x256xf32>
    tpu.vector_store %arg15[%c48, %c129], %46 {strides = array<i32>} : memref<144x512xf32, #tpu.memory_space<vmem>>, vector<16x256xf32>,
    %c64 = arith.constant 64 : index
    %c128_30 = arith.constant 128 : index
    %55 = vector.load %arg15[%c64, %c128_30] : memref<144x512xf32, #tpu.memory_space<vmem>>, vector<16x256xf32>
    tpu.vector_store %arg15[%c64, %c128_30], %42 {strides = array<i32>} : memref<144x512xf32, #tpu.memory_space<vmem>>, vector<16x256xf32>,
    %c80 = arith.constant 80 : index
    %c127 = arith.constant 127 : index
    %56 = vector.load %arg15[%c80, %c127] : memref<144x512xf32, #tpu.memory_space<vmem>>, vector<16x256xf32>
    tpu.vector_store %arg15[%c80, %c127], %50 {strides = array<i32>} : memref<144x512xf32, #tpu.memory_space<vmem>>, vector<16x256xf32>,
    %c96 = arith.constant 96 : index
    %c113 = arith.constant 113 : index
    %57 = vector.load %arg15[%c96, %c113] : memref<144x512xf32, #tpu.memory_space<vmem>>, vector<16x256xf32>
    tpu.vector_store %arg15[%c96, %c113], %46 {strides = array<i32>} : memref<144x512xf32, #tpu.memory_space<vmem>>, vector<16x256xf32>,
    %c112 = arith.constant 112 : index
    %c112_31 = arith.constant 112 : index
    %58 = vector.load %arg15[%c112, %c112_31] : memref<144x512xf32, #tpu.memory_space<vmem>>, vector<16x256xf32>
    tpu.vector_store %arg15[%c112, %c112_31], %42 {strides = array<i32>} : memref<144x512xf32, #tpu.memory_space<vmem>>, vector<16x256xf32>,
    %c128_32 = arith.constant 128 : index
    %c111 = arith.constant 111 : index
    %59 = vector.load %arg15[%c128_32, %c111] : memref<144x512xf32, #tpu.memory_space<vmem>>, vector<16x256xf32>
    tpu.vector_store %arg15[%c128_32, %c111], %50 {strides = array<i32>} : memref<144x512xf32, #tpu.memory_space<vmem>>, vector<16x256xf32>,
    %c0_33 = arith.constant 0 : index
    %c0_34 = arith.constant 0 : index
    %60 = vector.load %arg4[%c0_33, %c0_34] : memref<8x144xf32, #tpu.memory_space<vmem>>, vector<8x144xf32>
    %c0_35 = arith.constant 0 : index
    %c128_36 = arith.constant 128 : index
    %61 = vector.load %arg15[%c0_35, %c128_36] : memref<144x512xf32, #tpu.memory_space<vmem>>, vector<144x256xf32>
    %cst_37 = arith.constant dense<0.000000e+00> : vector<8x256xf32>
    %62 = tpu.matmul %60, %61, %cst_37 {dimension_numbers = #tpu.dot_dimension_numbers<[1], [0], [0], [1], [0, 0, 1, 1], [], []>} : vector<8x144xf32>, vector<144x256xf32>, vector<8x256xf32> -> vector<8x256xf32>
    %c0_38 = arith.constant 0 : index
    %c0_39 = arith.constant 0 : index
    %63 = vector.load %arg5[%c0_38, %c0_39] : memref<8x1xf32, #tpu.memory_space<vmem>>, vector<8x1xf32>
    %64 = vector.broadcast %63 : vector<8x1xf32> to vector<8x256xf32>
    %65 = arith.addf %62, %64 : vector<8x256xf32>
    %cst_40 = arith.constant 0.000000e+00 : f32
    %66 = vector.broadcast %cst_40 : f32 to vector<8x256xf32>
    %67 = arith.maximumf %65, %66 : vector<8x256xf32>
    %cst_41 = arith.constant 0.000000e+00 : f32
    %68 = vector.shape_cast %18 : vector<1x256xi1> to vector<1x256xi1>
    %69 = vector.broadcast %68 : vector<1x256xi1> to vector<8x256xi1>
    %70 = vector.broadcast %cst_41 : f32 to vector<8x256xf32>
    %71 = arith.select %69, %67, %70 : vector<8x256xi1>, vector<8x256xf32>
    %cst_42 = arith.constant 0.000000e+00 : f32
    %72 = vector.shape_cast %20 : vector<1x256xi1> to vector<1x256xi1>
    %73 = vector.broadcast %72 : vector<1x256xi1> to vector<8x256xi1>
    %74 = vector.broadcast %cst_42 : f32 to vector<8x256xf32>
    %75 = arith.select %73, %67, %74 : vector<8x256xi1>, vector<8x256xf32>
    %c0_43 = arith.constant 0 : index
    %c145_44 = arith.constant 145 : index
    %76 = vector.load %arg16[%c0_43, %c145_44] : memref<72x512xf32, #tpu.memory_space<vmem>>, vector<8x256xf32>
    tpu.vector_store %arg16[%c0_43, %c145_44], %71 {strides = array<i32>} : memref<72x512xf32, #tpu.memory_space<vmem>>, vector<8x256xf32>,
    %c8 = arith.constant 8 : index
    %c144_45 = arith.constant 144 : index
    %77 = vector.load %arg16[%c8, %c144_45] : memref<72x512xf32, #tpu.memory_space<vmem>>, vector<8x256xf32>
    tpu.vector_store %arg16[%c8, %c144_45], %67 {strides = array<i32>} : memref<72x512xf32, #tpu.memory_space<vmem>>, vector<8x256xf32>,
    %c16_46 = arith.constant 16 : index
    %c143_47 = arith.constant 143 : index
    %78 = vector.load %arg16[%c16_46, %c143_47] : memref<72x512xf32, #tpu.memory_space<vmem>>, vector<8x256xf32>
    tpu.vector_store %arg16[%c16_46, %c143_47], %75 {strides = array<i32>} : memref<72x512xf32, #tpu.memory_space<vmem>>, vector<8x256xf32>,
    %c24 = arith.constant 24 : index
    %c129_48 = arith.constant 129 : index
    %79 = vector.load %arg16[%c24, %c129_48] : memref<72x512xf32, #tpu.memory_space<vmem>>, vector<8x256xf32>
    tpu.vector_store %arg16[%c24, %c129_48], %71 {strides = array<i32>} : memref<72x512xf32, #tpu.memory_space<vmem>>, vector<8x256xf32>,
    %c32_49 = arith.constant 32 : index
    %c128_50 = arith.constant 128 : index
    %80 = vector.load %arg16[%c32_49, %c128_50] : memref<72x512xf32, #tpu.memory_space<vmem>>, vector<8x256xf32>
    tpu.vector_store %arg16[%c32_49, %c128_50], %67 {strides = array<i32>} : memref<72x512xf32, #tpu.memory_space<vmem>>, vector<8x256xf32>,
    %c40 = arith.constant 40 : index
    %c127_51 = arith.constant 127 : index
    %81 = vector.load %arg16[%c40, %c127_51] : memref<72x512xf32, #tpu.memory_space<vmem>>, vector<8x256xf32>
    tpu.vector_store %arg16[%c40, %c127_51], %75 {strides = array<i32>} : memref<72x512xf32, #tpu.memory_space<vmem>>, vector<8x256xf32>,
    %c48_52 = arith.constant 48 : index
    %c113_53 = arith.constant 113 : index
    %82 = vector.load %arg16[%c48_52, %c113_53] : memref<72x512xf32, #tpu.memory_space<vmem>>, vector<8x256xf32>
    tpu.vector_store %arg16[%c48_52, %c113_53], %71 {strides = array<i32>} : memref<72x512xf32, #tpu.memory_space<vmem>>, vector<8x256xf32>,
    %c56 = arith.constant 56 : index
    %c112_54 = arith.constant 112 : index
    %83 = vector.load %arg16[%c56, %c112_54] : memref<72x512xf32, #tpu.memory_space<vmem>>, vector<8x256xf32>
    tpu.vector_store %arg16[%c56, %c112_54], %67 {strides = array<i32>} : memref<72x512xf32, #tpu.memory_space<vmem>>, vector<8x256xf32>,
    %c64_55 = arith.constant 64 : index
    %c111_56 = arith.constant 111 : index
    %84 = vector.load %arg16[%c64_55, %c111_56] : memref<72x512xf32, #tpu.memory_space<vmem>>, vector<8x256xf32>
    tpu.vector_store %arg16[%c64_55, %c111_56], %75 {strides = array<i32>} : memref<72x512xf32, #tpu.memory_space<vmem>>, vector<8x256xf32>,
    %c0_57 = arith.constant 0 : index
    %c0_58 = arith.constant 0 : index
    %85 = vector.load %arg6[%c0_57, %c0_58] : memref<8x72xf32, #tpu.memory_space<vmem>>, vector<8x72xf32>
    %c0_59 = arith.constant 0 : index
    %c128_60 = arith.constant 128 : index
    %86 = vector.load %arg16[%c0_59, %c128_60] : memref<72x512xf32, #tpu.memory_space<vmem>>, vector<72x256xf32>
    %cst_61 = arith.constant dense<0.000000e+00> : vector<8x256xf32>
    %87 = tpu.matmul %85, %86, %cst_61 {dimension_numbers = #tpu.dot_dimension_numbers<[1], [0], [0], [1], [0, 0, 1, 1], [], []>} : vector<8x72xf32>, vector<72x256xf32>, vector<8x256xf32> -> vector<8x256xf32>
    %c0_62 = arith.constant 0 : index
    %c0_63 = arith.constant 0 : index
    %88 = vector.load %arg7[%c0_62, %c0_63] : memref<8x1xf32, #tpu.memory_space<vmem>>, vector<8x1xf32>
    %89 = vector.broadcast %88 : vector<8x1xf32> to vector<8x256xf32>
    %90 = arith.addf %87, %89 : vector<8x256xf32>
    %cst_64 = arith.constant 0.000000e+00 : f32
    %91 = vector.broadcast %cst_64 : f32 to vector<8x256xf32>
    %92 = arith.maximumf %90, %91 : vector<8x256xf32>
    %c0_65 = arith.constant 0 : index
    %c8_66 = arith.constant 8 : index
    %c0_67 = arith.constant 0 : index
    %93 = vector.load %arg14[%c0_65, %c8_66, %c0_67] : memref<1x24x256xf32, #tpu.memory_space<vmem>>, vector<1x8x256xf32>
    %94 = vector.shape_cast %93 : vector<1x8x256xf32> to vector<8x256xf32>
    %95 = vector.shape_cast %92 : vector<8x256xf32> to vector<1x8x256xf32>
    tpu.vector_store %arg14[%c0_65, %c8_66, %c0_67], %95 {strides = array<i32>} : memref<1x24x256xf32, #tpu.memory_space<vmem>>, vector<1x8x256xf32>,
    %c0_68 = arith.constant 0 : index
    %c0_69 = arith.constant 0 : index
    %96 = vector.load %arg8[%c0_68, %c0_69] : memref<16x16xf32, #tpu.memory_space<vmem>>, vector<16x16xf32>
    %c0_70 = arith.constant 0 : index
    %c0_71 = arith.constant 0 : index
    %c0_72 = arith.constant 0 : index
    %97 = vector.load %arg14[%c0_70, %c0_71, %c0_72] : memref<1x24x256xf32, #tpu.memory_space<vmem>>, vector<1x16x256xf32>
    %98 = vector.shape_cast %97 : vector<1x16x256xf32> to vector<16x256xf32>
    %cst_73 = arith.constant dense<0.000000e+00> : vector<16x256xf32>
    %99 = tpu.matmul %96, %98, %cst_73 {dimension_numbers = #tpu.dot_dimension_numbers<[1], [0], [0], [1], [0, 0, 1, 1], [], []>} : vector<16x16xf32>, vector<16x256xf32>, vector<16x256xf32> -> vector<16x256xf32>
    %c0_74 = arith.constant 0 : index
    %c0_75 = arith.constant 0 : index
    %100 = vector.load %arg9[%c0_74, %c0_75] : memref<16x1xf32, #tpu.memory_space<vmem>>, vector<16x1xf32>
    %101 = vector.broadcast %100 : vector<16x1xf32> to vector<16x256xf32>
    %102 = arith.addf %99, %101 : vector<16x256xf32>
    %cst_76 = arith.constant 0.000000e+00 : f32
    %103 = vector.broadcast %cst_76 : f32 to vector<16x256xf32>
    %104 = arith.maximumf %102, %103 : vector<16x256xf32>
    %cst_77 = arith.constant 0.000000e+00 : f32
    %105 = vector.shape_cast %18 : vector<1x256xi1> to vector<1x256xi1>
    %106 = vector.broadcast %105 : vector<1x256xi1> to vector<16x256xi1>
    %107 = vector.broadcast %cst_77 : f32 to vector<16x256xf32>
    %108 = arith.select %106, %104, %107 : vector<16x256xi1>, vector<16x256xf32>
    %cst_78 = arith.constant 0.000000e+00 : f32
    %109 = vector.shape_cast %20 : vector<1x256xi1> to vector<1x256xi1>
    %110 = vector.broadcast %109 : vector<1x256xi1> to vector<16x256xi1>
    %111 = vector.broadcast %cst_78 : f32 to vector<16x256xf32>
    %112 = arith.select %110, %104, %111 : vector<16x256xi1>, vector<16x256xf32>
    %c0_79 = arith.constant 0 : index
    %c145_80 = arith.constant 145 : index
    %113 = vector.load %arg15[%c0_79, %c145_80] : memref<144x512xf32, #tpu.memory_space<vmem>>, vector<16x256xf32>
    tpu.vector_store %arg15[%c0_79, %c145_80], %108 {strides = array<i32>} : memref<144x512xf32, #tpu.memory_space<vmem>>, vector<16x256xf32>,
    %c16_81 = arith.constant 16 : index
    %c144_82 = arith.constant 144 : index
    %114 = vector.load %arg15[%c16_81, %c144_82] : memref<144x512xf32, #tpu.memory_space<vmem>>, vector<16x256xf32>
    tpu.vector_store %arg15[%c16_81, %c144_82], %104 {strides = array<i32>} : memref<144x512xf32, #tpu.memory_space<vmem>>, vector<16x256xf32>,
    %c32_83 = arith.constant 32 : index
    %c143_84 = arith.constant 143 : index
    %115 = vector.load %arg15[%c32_83, %c143_84] : memref<144x512xf32, #tpu.memory_space<vmem>>, vector<16x256xf32>
    tpu.vector_store %arg15[%c32_83, %c143_84], %112 {strides = array<i32>} : memref<144x512xf32, #tpu.memory_space<vmem>>, vector<16x256xf32>,
    %c48_85 = arith.constant 48 : index
    %c129_86 = arith.constant 129 : index
    %116 = vector.load %arg15[%c48_85, %c129_86] : memref<144x512xf32, #tpu.memory_space<vmem>>, vector<16x256xf32>
    tpu.vector_store %arg15[%c48_85, %c129_86], %108 {strides = array<i32>} : memref<144x512xf32, #tpu.memory_space<vmem>>, vector<16x256xf32>,
    %c64_87 = arith.constant 64 : index
    %c128_88 = arith.constant 128 : index
    %117 = vector.load %arg15[%c64_87, %c128_88] : memref<144x512xf32, #tpu.memory_space<vmem>>, vector<16x256xf32>
    tpu.vector_store %arg15[%c64_87, %c128_88], %104 {strides = array<i32>} : memref<144x512xf32, #tpu.memory_space<vmem>>, vector<16x256xf32>,
    %c80_89 = arith.constant 80 : index
    %c127_90 = arith.constant 127 : index
    %118 = vector.load %arg15[%c80_89, %c127_90] : memref<144x512xf32, #tpu.memory_space<vmem>>, vector<16x256xf32>
    tpu.vector_store %arg15[%c80_89, %c127_90], %112 {strides = array<i32>} : memref<144x512xf32, #tpu.memory_space<vmem>>, vector<16x256xf32>,
    %c96_91 = arith.constant 96 : index
    %c113_92 = arith.constant 113 : index
    %119 = vector.load %arg15[%c96_91, %c113_92] : memref<144x512xf32, #tpu.memory_space<vmem>>, vector<16x256xf32>
    tpu.vector_store %arg15[%c96_91, %c113_92], %108 {strides = array<i32>} : memref<144x512xf32, #tpu.memory_space<vmem>>, vector<16x256xf32>,
    %c112_93 = arith.constant 112 : index
    %c112_94 = arith.constant 112 : index
    %120 = vector.load %arg15[%c112_93, %c112_94] : memref<144x512xf32, #tpu.memory_space<vmem>>, vector<16x256xf32>
    tpu.vector_store %arg15[%c112_93, %c112_94], %104 {strides = array<i32>} : memref<144x512xf32, #tpu.memory_space<vmem>>, vector<16x256xf32>,
    %c128_95 = arith.constant 128 : index
    %c111_96 = arith.constant 111 : index
    %121 = vector.load %arg15[%c128_95, %c111_96] : memref<144x512xf32, #tpu.memory_space<vmem>>, vector<16x256xf32>
    tpu.vector_store %arg15[%c128_95, %c111_96], %112 {strides = array<i32>} : memref<144x512xf32, #tpu.memory_space<vmem>>, vector<16x256xf32>,
    %c0_97 = arith.constant 0 : index
    %c0_98 = arith.constant 0 : index
    %122 = vector.load %arg10[%c0_97, %c0_98] : memref<8x144xf32, #tpu.memory_space<vmem>>, vector<8x144xf32>
    %c0_99 = arith.constant 0 : index
    %c128_100 = arith.constant 128 : index
    %123 = vector.load %arg15[%c0_99, %c128_100] : memref<144x512xf32, #tpu.memory_space<vmem>>, vector<144x256xf32>
    %cst_101 = arith.constant dense<0.000000e+00> : vector<8x256xf32>
    %124 = tpu.matmul %122, %123, %cst_101 {dimension_numbers = #tpu.dot_dimension_numbers<[1], [0], [0], [1], [0, 0, 1, 1], [], []>} : vector<8x144xf32>, vector<144x256xf32>, vector<8x256xf32> -> vector<8x256xf32>
    %c0_102 = arith.constant 0 : index
    %c0_103 = arith.constant 0 : index
    %125 = vector.load %arg11[%c0_102, %c0_103] : memref<8x1xf32, #tpu.memory_space<vmem>>, vector<8x1xf32>
    %126 = vector.broadcast %125 : vector<8x1xf32> to vector<8x256xf32>
    %127 = arith.addf %124, %126 : vector<8x256xf32>
    %cst_104 = arith.constant 0.000000e+00 : f32
    %128 = vector.broadcast %cst_104 : f32 to vector<8x256xf32>
    %129 = arith.maximumf %127, %128 : vector<8x256xf32>
    %cst_105 = arith.constant 0.000000e+00 : f32
    %130 = vector.shape_cast %18 : vector<1x256xi1> to vector<1x256xi1>
    %131 = vector.broadcast %130 : vector<1x256xi1> to vector<8x256xi1>
    %132 = vector.broadcast %cst_105 : f32 to vector<8x256xf32>
    %133 = arith.select %131, %129, %132 : vector<8x256xi1>, vector<8x256xf32>
    %cst_106 = arith.constant 0.000000e+00 : f32
    %134 = vector.shape_cast %20 : vector<1x256xi1> to vector<1x256xi1>
    %135 = vector.broadcast %134 : vector<1x256xi1> to vector<8x256xi1>
    %136 = vector.broadcast %cst_106 : f32 to vector<8x256xf32>
    %137 = arith.select %135, %129, %136 : vector<8x256xi1>, vector<8x256xf32>
    %c0_107 = arith.constant 0 : index
    %c145_108 = arith.constant 145 : index
    %138 = vector.load %arg16[%c0_107, %c145_108] : memref<72x512xf32, #tpu.memory_space<vmem>>, vector<8x256xf32>
    tpu.vector_store %arg16[%c0_107, %c145_108], %133 {strides = array<i32>} : memref<72x512xf32, #tpu.memory_space<vmem>>, vector<8x256xf32>,
    %c8_109 = arith.constant 8 : index
    %c144_110 = arith.constant 144 : index
    %139 = vector.load %arg16[%c8_109, %c144_110] : memref<72x512xf32, #tpu.memory_space<vmem>>, vector<8x256xf32>
    tpu.vector_store %arg16[%c8_109, %c144_110], %129 {strides = array<i32>} : memref<72x512xf32, #tpu.memory_space<vmem>>, vector<8x256xf32>,
    %c16_111 = arith.constant 16 : index
    %c143_112 = arith.constant 143 : index
    %140 = vector.load %arg16[%c16_111, %c143_112] : memref<72x512xf32, #tpu.memory_space<vmem>>, vector<8x256xf32>
    tpu.vector_store %arg16[%c16_111, %c143_112], %137 {strides = array<i32>} : memref<72x512xf32, #tpu.memory_space<vmem>>, vector<8x256xf32>,
    %c24_113 = arith.constant 24 : index
    %c129_114 = arith.constant 129 : index
    %141 = vector.load %arg16[%c24_113, %c129_114] : memref<72x512xf32, #tpu.memory_space<vmem>>, vector<8x256xf32>
    tpu.vector_store %arg16[%c24_113, %c129_114], %133 {strides = array<i32>} : memref<72x512xf32, #tpu.memory_space<vmem>>, vector<8x256xf32>,
    %c32_115 = arith.constant 32 : index
    %c128_116 = arith.constant 128 : index
    %142 = vector.load %arg16[%c32_115, %c128_116] : memref<72x512xf32, #tpu.memory_space<vmem>>, vector<8x256xf32>
    tpu.vector_store %arg16[%c32_115, %c128_116], %129 {strides = array<i32>} : memref<72x512xf32, #tpu.memory_space<vmem>>, vector<8x256xf32>,
    %c40_117 = arith.constant 40 : index
    %c127_118 = arith.constant 127 : index
    %143 = vector.load %arg16[%c40_117, %c127_118] : memref<72x512xf32, #tpu.memory_space<vmem>>, vector<8x256xf32>
    tpu.vector_store %arg16[%c40_117, %c127_118], %137 {strides = array<i32>} : memref<72x512xf32, #tpu.memory_space<vmem>>, vector<8x256xf32>,
    %c48_119 = arith.constant 48 : index
    %c113_120 = arith.constant 113 : index
    %144 = vector.load %arg16[%c48_119, %c113_120] : memref<72x512xf32, #tpu.memory_space<vmem>>, vector<8x256xf32>
    tpu.vector_store %arg16[%c48_119, %c113_120], %133 {strides = array<i32>} : memref<72x512xf32, #tpu.memory_space<vmem>>, vector<8x256xf32>,
    %c56_121 = arith.constant 56 : index
    %c112_122 = arith.constant 112 : index
    %145 = vector.load %arg16[%c56_121, %c112_122] : memref<72x512xf32, #tpu.memory_space<vmem>>, vector<8x256xf32>
    tpu.vector_store %arg16[%c56_121, %c112_122], %129 {strides = array<i32>} : memref<72x512xf32, #tpu.memory_space<vmem>>, vector<8x256xf32>,
    %c64_123 = arith.constant 64 : index
    %c111_124 = arith.constant 111 : index
    %146 = vector.load %arg16[%c64_123, %c111_124] : memref<72x512xf32, #tpu.memory_space<vmem>>, vector<8x256xf32>
    tpu.vector_store %arg16[%c64_123, %c111_124], %137 {strides = array<i32>} : memref<72x512xf32, #tpu.memory_space<vmem>>, vector<8x256xf32>,
    %c0_125 = arith.constant 0 : index
    %c0_126 = arith.constant 0 : index
    %147 = vector.load %arg12[%c0_125, %c0_126] : memref<8x72xf32, #tpu.memory_space<vmem>>, vector<8x72xf32>
    %c0_127 = arith.constant 0 : index
    %c128_128 = arith.constant 128 : index
    %148 = vector.load %arg16[%c0_127, %c128_128] : memref<72x512xf32, #tpu.memory_space<vmem>>, vector<72x256xf32>
    %cst_129 = arith.constant dense<0.000000e+00> : vector<8x256xf32>
    %149 = tpu.matmul %147, %148, %cst_129 {dimension_numbers = #tpu.dot_dimension_numbers<[1], [0], [0], [1], [0, 0, 1, 1], [], []>} : vector<8x72xf32>, vector<72x256xf32>, vector<8x256xf32> -> vector<8x256xf32>
    %c0_130 = arith.constant 0 : index
    %c0_131 = arith.constant 0 : index
    %150 = vector.load %arg13[%c0_130, %c0_131] : memref<8x1xf32, #tpu.memory_space<vmem>>, vector<8x1xf32>
    %151 = vector.broadcast %150 : vector<8x1xf32> to vector<8x256xf32>
    %152 = arith.addf %149, %151 : vector<8x256xf32>
    %cst_132 = arith.constant 0.000000e+00 : f32
    %153 = vector.broadcast %cst_132 : f32 to vector<8x256xf32>
    %154 = arith.maximumf %152, %153 : vector<8x256xf32>
    %c0_133 = arith.constant 0 : index
    %c16_134 = arith.constant 16 : index
    %c0_135 = arith.constant 0 : index
    %155 = vector.load %arg14[%c0_133, %c16_134, %c0_135] : memref<1x24x256xf32, #tpu.memory_space<vmem>>, vector<1x8x256xf32>
    %156 = vector.shape_cast %155 : vector<1x8x256xf32> to vector<8x256xf32>
    %157 = vector.shape_cast %154 : vector<8x256xf32> to vector<1x8x256xf32>
    tpu.vector_store %arg14[%c0_133, %c16_134, %c0_135], %157 {strides = array<i32>} : memref<1x24x256xf32, #tpu.memory_space<vmem>>, vector<1x8x256xf32>,
    return
  }
  func.func @transform_0(%arg0: i32) -> (i32, i32, i32) {
    %c0_i32 = arith.constant 0 : i32
    %c0_i32_0 = arith.constant 0 : i32
    %c0_i32_1 = arith.constant 0 : i32
    return %arg0, %c0_i32, %c0_i32_0 : i32, i32, i32
  }
  func.func @transform_1(%arg0: i32) -> (i32, i32) {
    %c0_i32 = arith.constant 0 : i32
    %c0_i32_0 = arith.constant 0 : i32
    %c0_i32_1 = arith.constant 0 : i32
    return %c0_i32, %c0_i32_0 : i32, i32
  }
  func.func @transform_2(%arg0: i32) -> (i32, i32) {
    %c0_i32 = arith.constant 0 : i32
    %c0_i32_0 = arith.constant 0 : i32
    %c0_i32_1 = arith.constant 0 : i32
    return %c0_i32, %c0_i32_0 : i32, i32
  }
  func.func @transform_3(%arg0: i32) -> (i32, i32) {
    %c0_i32 = arith.constant 0 : i32
    %c0_i32_0 = arith.constant 0 : i32
    %c0_i32_1 = arith.constant 0 : i32
    return %c0_i32, %c0_i32_0 : i32, i32
  }
  func.func @transform_4(%arg0: i32) -> (i32, i32) {
    %c0_i32 = arith.constant 0 : i32
    %c0_i32_0 = arith.constant 0 : i32
    %c0_i32_1 = arith.constant 0 : i32
    return %c0_i32, %c0_i32_0 : i32, i32
  }
  func.func @transform_5(%arg0: i32) -> (i32, i32) {
    %c0_i32 = arith.constant 0 : i32
    %c0_i32_0 = arith.constant 0 : i32
    %c0_i32_1 = arith.constant 0 : i32
    return %c0_i32, %c0_i32_0 : i32, i32
  }
  func.func @transform_6(%arg0: i32) -> (i32, i32) {
    %c0_i32 = arith.constant 0 : i32
    %c0_i32_0 = arith.constant 0 : i32
    %c0_i32_1 = arith.constant 0 : i32
    return %c0_i32, %c0_i32_0 : i32, i32
  }
  func.func @transform_7(%arg0: i32) -> (i32, i32) {
    %c0_i32 = arith.constant 0 : i32
    %c0_i32_0 = arith.constant 0 : i32
    %c0_i32_1 = arith.constant 0 : i32
    return %c0_i32, %c0_i32_0 : i32, i32
  }
  func.func @transform_8(%arg0: i32) -> (i32, i32) {
    %c0_i32 = arith.constant 0 : i32
    %c0_i32_0 = arith.constant 0 : i32
    %c0_i32_1 = arith.constant 0 : i32
    return %c0_i32, %c0_i32_0 : i32, i32
  }
  func.func @transform_9(%arg0: i32) -> (i32, i32) {
    %c0_i32 = arith.constant 0 : i32
    %c0_i32_0 = arith.constant 0 : i32
    %c0_i32_1 = arith.constant 0 : i32
    return %c0_i32, %c0_i32_0 : i32, i32
  }
  func.func @transform_10(%arg0: i32) -> (i32, i32) {
    %c0_i32 = arith.constant 0 : i32
    %c0_i32_0 = arith.constant 0 : i32
    %c0_i32_1 = arith.constant 0 : i32
    return %c0_i32, %c0_i32_0 : i32, i32
  }
  func.func @transform_11(%arg0: i32) -> (i32, i32) {
    %c0_i32 = arith.constant 0 : i32
    %c0_i32_0 = arith.constant 0 : i32
    %c0_i32_1 = arith.constant 0 : i32
    return %c0_i32, %c0_i32_0 : i32, i32
  }
  func.func @transform_12(%arg0: i32) -> (i32, i32) {
    %c0_i32 = arith.constant 0 : i32
    %c0_i32_0 = arith.constant 0 : i32
    %c0_i32_1 = arith.constant 0 : i32
    return %c0_i32, %c0_i32_0 : i32, i32
  }
  func.func @transform_13(%arg0: i32) -> (i32, i32, i32) {
    %c0_i32 = arith.constant 0 : i32
    %c0_i32_0 = arith.constant 0 : i32
    %c0_i32_1 = arith.constant 0 : i32
    return %arg0, %c0_i32, %c0_i32_0 : i32, i32, i32
  }
}

</mosaic_0001>

<llo_original>
// kernel: dense_block_apply.1
$region0: #{dense_block_apply.1}
  #allocation0 [shape = 'u32[]', space=smem, size = 0x4, offset = 0x4, fixed_abs, tag = 'smem constant byte address 0x4 - core index']
  #allocation1 [shape = 'u32[144,128]{1,0:T(1,128)}', space=vmem, size = 0x12000, scoped, tag = 'internal scratch']
  #allocation2 [shape = 'f32[144,512]{1,0:T(8,128)}', space=vmem, size = 0x48000, scoped, tag = 'scratch operand']
  #allocation3 [shape = 'f32[72,512]{1,0:T(8,128)}', space=vmem, size = 0x24000, scoped, tag = 'scratch operand']
  %s0 = inlined_call_operand.vmem [shape: f32[2,8,256], index: 0, kind: input, shape index: {}]
  %s1 = inlined_call_operand.vmem [shape: f32[16,8], index: 1, kind: input, shape index: {}]
  %s2 = inlined_call_operand.vmem [shape: f32[16,1], index: 2, kind: input, shape index: {}]
  %s3 = inlined_call_operand.vmem [shape: f32[8,144], index: 3, kind: input, shape index: {}]
  %s4 = inlined_call_operand.vmem [shape: f32[8,1], index: 4, kind: input, shape index: {}]
  %s5 = inlined_call_operand.vmem [shape: f32[8,72], index: 5, kind: input, shape index: {}]
  %s6 = inlined_call_operand.vmem [shape: f32[8,1], index: 6, kind: input, shape index: {}]
  %s7 = inlined_call_operand.vmem [shape: f32[16,16], index: 7, kind: input, shape index: {}]
  %s8 = inlined_call_operand.vmem [shape: f32[16,1], index: 8, kind: input, shape index: {}]
  %s9 = inlined_call_operand.vmem [shape: f32[8,144], index: 9, kind: input, shape index: {}]
  %s10 = inlined_call_operand.vmem [shape: f32[8,1], index: 10, kind: input, shape index: {}]
  %s11 = inlined_call_operand.vmem [shape: f32[8,72], index: 11, kind: input, shape index: {}]
  %s12 = inlined_call_operand.vmem [shape: f32[8,1], index: 12, kind: input, shape index: {}]
  %s13 = inlined_call_operand.vmem [shape: f32[2,24,256], index: 13, kind: output, shape index: {}]
  %s14 = sld [smem:[#allocation0]]
  $region85: #{dense_block_apply.1} parent=0
    _
  %s16 = ssub.s32 1, %s14
  %s17 = scalar_select 0, %s16, %s14
  loop: start=0, step=1, limit=4
  $region2: #{dense_block_apply.1} parent=0 // loop_pre_header
    _
  $region3: #{dense_block_apply.1} parent=0 // loop_header
    %s19 = sphi 0, %s23
    %p20 = scmp.ge.s32.totalorder %s19, 4
    %s29 = sphi 0, %s31
    %s32 = sphi 0, %s29
    %s33 = sphi 0, %s32
    %s49 = sphi 0, %s33
    %s53 = sphi 0, %s53
    %s55 = sphi 0, %s53
    %s56 = sphi 0, %s55
    %s70 = sphi 0, %s56
    %s74 = sphi 0, %s74
    %s76 = sphi 0, %s74
    %s77 = sphi 0, %s76
    %s91 = sphi 0, %s77
    %s95 = sphi 0, %s95
    %s97 = sphi 0, %s95
    %s98 = sphi 0, %s97
    %s112 = sphi 0, %s98
    %s116 = sphi 0, %s116
    %s118 = sphi 0, %s116
    %s119 = sphi 0, %s118
    %s133 = sphi 0, %s119
    %s137 = sphi 0, %s137
    %s139 = sphi 0, %s137
    %s140 = sphi 0, %s139
    %s154 = sphi 0, %s140
    %s158 = sphi 0, %s158
    %s160 = sphi 0, %s158
    %s161 = sphi 0, %s160
    %s175 = sphi 0, %s161
    %s179 = sphi 0, %s179
    %s181 = sphi 0, %s179
    %s182 = sphi 0, %s181
    %s196 = sphi 0, %s182
    %s200 = sphi 0, %s200
    %s202 = sphi 0, %s200
    %s203 = sphi 0, %s202
    %s217 = sphi 0, %s203
    %s221 = sphi 0, %s221
    %s223 = sphi 0, %s221
    %s224 = sphi 0, %s223
    %s238 = sphi 0, %s224
    %s242 = sphi 0, %s242
    %s244 = sphi 0, %s242
    %s245 = sphi 0, %s244
    %s259 = sphi 0, %s245
    %s263 = sphi 0, %s263
    %s265 = sphi 0, %s263
    %s266 = sphi 0, %s265
    %s280 = sphi 0, %s266
    %s284 = sphi 0, %s284
    %s286 = sphi 0, %s284
    %s287 = sphi 0, %s286
    %s301 = sphi 0, %s287
    %s307 = sphi 0, %s309
    %s310 = sphi 0, %s307
    %s311 = sphi 0, %s310
    %s327 = sphi 0, %s311
  $region4: #{dense_block_apply.1} parent=0 // loop_header_branch
    %22 = sbr.rel (%p20) target = $region8
  $region5: #{dense_block_apply.1} parent=0 // loop_body
    %s24 = ssub.s32 %s19, 1
    %s25 = ssub.s32 %s19, 2
    %s26 = sadd.s32 %s19, 1
    %s27 = ssub.s32 %s19, %s26
    %p28 = scmp.eq.s32.totalorder %s27, 0
    %s30 = sadd.s32 %s29, 1
    %s31 = scalar_select %p28, %s29, %s30
    %p34 = pneg %p28
    %p35 = scmp.eq.s32.totalorder %s19, 1
    %p36 = por %p34, %p35
    %p37 = scmp.ne.s32.totalorder %s29, %s32
    %p38 = scmp.eq.s32.totalorder %s19, 0
    %p39 = por %p37, %p38
    %p40 = scmp.ne.s32.totalorder %s29, %s32
    %p41 = scmp.eq.s32.totalorder %s24, 1
    %p42 = por %p40, %p41
    %p43 = scmp.ne.s32.totalorder %s32, %s33
    %p44 = scmp.eq.s32.totalorder %s24, 0
    %p45 = por %p43, %p44
    %p46 = scmp.ne.s32.totalorder %s32, %s33
    %p47 = scmp.eq.s32.totalorder %s25, 1
    %p48 = por %p46, %p47
    %p50 = scmp.ne.s32.totalorder %s33, %s49
    %p51 = scmp.eq.s32.totalorder %s25, 0
    %p52 = por %p50, %p51
    %s54 = sadd.s32 %s53, 1
    %p57 = scmp.eq.s32.totalorder %s19, 1
    %p58 = scmp.ne.s32.totalorder %s53, %s55
    %p59 = scmp.eq.s32.totalorder %s19, 0
    %p60 = por %p58, %p59
    %p61 = scmp.ne.s32.totalorder %s53, %s55
    %p62 = scmp.eq.s32.totalorder %s24, 1
    %p63 = por %p61, %p62
    %p64 = scmp.ne.s32.totalorder %s55, %s56
    %p65 = scmp.eq.s32.totalorder %s24, 0
    %p66 = por %p64, %p65
    %p67 = scmp.ne.s32.totalorder %s55, %s56
    %p68 = scmp.eq.s32.totalorder %s25, 1
    %p69 = por %p67, %p68
    %p71 = scmp.ne.s32.totalorder %s56, %s70
    %p72 = scmp.eq.s32.totalorder %s25, 0
    %p73 = por %p71, %p72
    %s75 = sadd.s32 %s74, 1
    %p78 = scmp.eq.s32.totalorder %s19, 1
    %p79 = scmp.ne.s32.totalorder %s74, %s76
    %p80 = scmp.eq.s32.totalorder %s19, 0
    %p81 = por %p79, %p80
    %p82 = scmp.ne.s32.totalorder %s74, %s76
    %p83 = scmp.eq.s32.totalorder %s24, 1
    %p84 = por %p82, %p83
    %p85 = scmp.ne.s32.totalorder %s76, %s77
    %p86 = scmp.eq.s32.totalorder %s24, 0
    %p87 = por %p85, %p86
    %p88 = scmp.ne.s32.totalorder %s76, %s77
    %p89 = scmp.eq.s32.totalorder %s25, 1
    %p90 = por %p88, %p89
    %p92 = scmp.ne.s32.totalorder %s77, %s91
    %p93 = scmp.eq.s32.totalorder %s25, 0
    %p94 = por %p92, %p93
    %s96 = sadd.s32 %s95, 1
    %p99 = scmp.eq.s32.totalorder %s19, 1
    %p100 = scmp.ne.s32.totalorder %s95, %s97
    %p101 = scmp.eq.s32.totalorder %s19, 0
    %p102 = por %p100, %p101
    %p103 = scmp.ne.s32.totalorder %s95, %s97
    %p104 = scmp.eq.s32.totalorder %s24, 1
    %p105 = por %p103, %p104
    %p106 = scmp.ne.s32.totalorder %s97, %s98
    %p107 = scmp.eq.s32.totalorder %s24, 0
    %p108 = por %p106, %p107
    %p109 = scmp.ne.s32.totalorder %s97, %s98
    %p110 = scmp.eq.s32.totalorder %s25, 1
    %p111 = por %p109, %p110
    %p113 = scmp.ne.s32.totalorder %s98, %s112
    %p114 = scmp.eq.s32.totalorder %s25, 0
    %p115 = por %p113, %p114
    %s117 = sadd.s32 %s116, 1
    %p120 = scmp.eq.s32.totalorder %s19, 1
    %p121 = scmp.ne.s32.totalorder %s116, %s118
    %p122 = scmp.eq.s32.totalorder %s19, 0
    %p123 = por %p121, %p122
    %p124 = scmp.ne.s32.totalorder %s116, %s118
    %p125 = scmp.eq.s32.totalorder %s24, 1
    %p126 = por %p124, %p125
    %p127 = scmp.ne.s32.totalorder %s118, %s119
    %p128 = scmp.eq.s32.totalorder %s24, 0
    %p129 = por %p127, %p128
    %p130 = scmp.ne.s32.totalorder %s118, %s119
    %p131 = scmp.eq.s32.totalorder %s25, 1
    %p132 = por %p130, %p131
    %p134 = scmp.ne.s32.totalorder %s119, %s133
    %p135 = scmp.eq.s32.totalorder %s25, 0
    %p136 = por %p134, %p135
    %s138 = sadd.s32 %s137, 1
    %p141 = scmp.eq.s32.totalorder %s19, 1
    %p142 = scmp.ne.s32.totalorder %s137, %s139
    %p143 = scmp.eq.s32.totalorder %s19, 0
    %p144 = por %p142, %p143
    %p145 = scmp.ne.s32.totalorder %s137, %s139
    %p146 = scmp.eq.s32.totalorder %s24, 1
    %p147 = por %p145, %p146
    %p148 = scmp.ne.s32.totalorder %s139, %s140
    %p149 = scmp.eq.s32.totalorder %s24, 0
    %p150 = por %p148, %p149
    %p151 = scmp.ne.s32.totalorder %s139, %s140
    %p152 = scmp.eq.s32.totalorder %s25, 1
    %p153 = por %p151, %p152
    %p155 = scmp.ne.s32.totalorder %s140, %s154
    %p156 = scmp.eq.s32.totalorder %s25, 0
    %p157 = por %p155, %p156
    %s159 = sadd.s32 %s158, 1
    %p162 = scmp.eq.s32.totalorder %s19, 1
    %p163 = scmp.ne.s32.totalorder %s158, %s160
    %p164 = scmp.eq.s32.totalorder %s19, 0
    %p165 = por %p163, %p164
    %p166 = scmp.ne.s32.totalorder %s158, %s160
    %p167 = scmp.eq.s32.totalorder %s24, 1
    %p168 = por %p166, %p167
    %p169 = scmp.ne.s32.totalorder %s160, %s161
    %p170 = scmp.eq.s32.totalorder %s24, 0
    %p171 = por %p169, %p170
    %p172 = scmp.ne.s32.totalorder %s160, %s161
    %p173 = scmp.eq.s32.totalorder %s25, 1
    %p174 = por %p172, %p173
    %p176 = scmp.ne.s32.totalorder %s161, %s175
    %p177 = scmp.eq.s32.totalorder %s25, 0
    %p178 = por %p176, %p177
    %s180 = sadd.s32 %s179, 1
    %p183 = scmp.eq.s32.totalorder %s19, 1
    %p184 = scmp.ne.s32.totalorder %s179, %s181
    %p185 = scmp.eq.s32.totalorder %s19, 0
    %p186 = por %p184, %p185
    %p187 = scmp.ne.s32.totalorder %s179, %s181
    %p188 = scmp.eq.s32.totalorder %s24, 1
    %p189 = por %p187, %p188
    %p190 = scmp.ne.s32.totalorder %s181, %s182
    %p191 = scmp.eq.s32.totalorder %s24, 0
    %p192 = por %p190, %p191
    %p193 = scmp.ne.s32.totalorder %s181, %s182
    %p194 = scmp.eq.s32.totalorder %s25, 1
    %p195 = por %p193, %p194
    %p197 = scmp.ne.s32.totalorder %s182, %s196
    %p198 = scmp.eq.s32.totalorder %s25, 0
    %p199 = por %p197, %p198
    %s201 = sadd.s32 %s200, 1
    %p204 = scmp.eq.s32.totalorder %s19, 1
    %p205 = scmp.ne.s32.totalorder %s200, %s202
    %p206 = scmp.eq.s32.totalorder %s19, 0
    %p207 = por %p205, %p206
    %p208 = scmp.ne.s32.totalorder %s200, %s202
    %p209 = scmp.eq.s32.totalorder %s24, 1
    %p210 = por %p208, %p209
    %p211 = scmp.ne.s32.totalorder %s202, %s203
    %p212 = scmp.eq.s32.totalorder %s24, 0
    %p213 = por %p211, %p212
    %p214 = scmp.ne.s32.totalorder %s202, %s203
    %p215 = scmp.eq.s32.totalorder %s25, 1
    %p216 = por %p214, %p215
    %p218 = scmp.ne.s32.totalorder %s203, %s217
    %p219 = scmp.eq.s32.totalorder %s25, 0
    %p220 = por %p218, %p219
    %s222 = sadd.s32 %s221, 1
    %p225 = scmp.eq.s32.totalorder %s19, 1
    %p226 = scmp.ne.s32.totalorder %s221, %s223
    %p227 = scmp.eq.s32.totalorder %s19, 0
    %p228 = por %p226, %p227
    %p229 = scmp.ne.s32.totalorder %s221, %s223
    %p230 = scmp.eq.s32.totalorder %s24, 1
    %p231 = por %p229, %p230
    %p232 = scmp.ne.s32.totalorder %s223, %s224
    %p233 = scmp.eq.s32.totalorder %s24, 0
    %p234 = por %p232, %p233
    %p235 = scmp.ne.s32.totalorder %s223, %s224
    %p236 = scmp.eq.s32.totalorder %s25, 1
    %p237 = por %p235, %p236
    %p239 = scmp.ne.s32.totalorder %s224, %s238
    %p240 = scmp.eq.s32.totalorder %s25, 0
    %p241 = por %p239, %p240
    %s243 = sadd.s32 %s242, 1
    %p246 = scmp.eq.s32.totalorder %s19, 1
    %p247 = scmp.ne.s32.totalorder %s242, %s244
    %p248 = scmp.eq.s32.totalorder %s19, 0
    %p249 = por %p247, %p248
    %p250 = scmp.ne.s32.totalorder %s242, %s244
    %p251 = scmp.eq.s32.totalorder %s24, 1
    %p252 = por %p250, %p251
    %p253 = scmp.ne.s32.totalorder %s244, %s245
    %p254 = scmp.eq.s32.totalorder %s24, 0
    %p255 = por %p253, %p254
    %p256 = scmp.ne.s32.totalorder %s244, %s245
    %p257 = scmp.eq.s32.totalorder %s25, 1
    %p258 = por %p256, %p257
    %p260 = scmp.ne.s32.totalorder %s245, %s259
    %p261 = scmp.eq.s32.totalorder %s25, 0
    %p262 = por %p260, %p261
    %s264 = sadd.s32 %s263, 1
    %p267 = scmp.eq.s32.totalorder %s19, 1
    %p268 = scmp.ne.s32.totalorder %s263, %s265
    %p269 = scmp.eq.s32.totalorder %s19, 0
    %p270 = por %p268, %p269
    %p271 = scmp.ne.s32.totalorder %s263, %s265
    %p272 = scmp.eq.s32.totalorder %s24, 1
    %p273 = por %p271, %p272
    %p274 = scmp.ne.s32.totalorder %s265, %s266
    %p275 = scmp.eq.s32.totalorder %s24, 0
    %p276 = por %p274, %p275
    %p277 = scmp.ne.s32.totalorder %s265, %s266
    %p278 = scmp.eq.s32.totalorder %s25, 1
    %p279 = por %p277, %p278
    %p281 = scmp.ne.s32.totalorder %s266, %s280
    %p282 = scmp.eq.s32.totalorder %s25, 0
    %p283 = por %p281, %p282
    %s285 = sadd.s32 %s284, 1
    %p288 = scmp.eq.s32.totalorder %s19, 1
    %p289 = scmp.ne.s32.totalorder %s284, %s286
    %p290 = scmp.eq.s32.totalorder %s19, 0
    %p291 = por %p289, %p290
    %p292 = scmp.ne.s32.totalorder %s284, %s286
    %p293 = scmp.eq.s32.totalorder %s24, 1
    %p294 = por %p292, %p293
    %p295 = scmp.ne.s32.totalorder %s286, %s287
    %p296 = scmp.eq.s32.totalorder %s24, 0
    %p297 = por %p295, %p296
    %p298 = scmp.ne.s32.totalorder %s286, %s287
    %p299 = scmp.eq.s32.totalorder %s25, 1
    %p300 = por %p298, %p299
    %p302 = scmp.ne.s32.totalorder %s287, %s301
    %p303 = scmp.eq.s32.totalorder %s25, 0
    %p304 = por %p302, %p303
    %s305 = ssub.s32 %s19, %s26
    %p306 = scmp.eq.s32.totalorder %s305, 0
    %s308 = sadd.s32 %s307, 1
    %s309 = scalar_select %p306, %s307, %s308
    %p312 = pneg %p306
    %p313 = scmp.eq.s32.totalorder %s19, 1
    %p314 = por %p312, %p313
    %p315 = scmp.ne.s32.totalorder %s307, %s310
    %p316 = scmp.eq.s32.totalorder %s19, 0
    %p317 = por %p315, %p316
    %p318 = scmp.ne.s32.totalorder %s307, %s310
    %p319 = scmp.eq.s32.totalorder %s24, 1
    %p320 = por %p318, %p319
    %p321 = scmp.ne.s32.totalorder %s310, %s311
    %p322 = scmp.eq.s32.totalorder %s24, 0
    %p323 = por %p321, %p322
    %p324 = scmp.ne.s32.totalorder %s310, %s311
    %p325 = scmp.eq.s32.totalorder %s25, 1
    %p326 = por %p324, %p325
    %p328 = scmp.ne.s32.totalorder %s311, %s327
    %p329 = scmp.eq.s32.totalorder %s25, 0
    %p330 = por %p328, %p329
    %p331 = scmp.le.s32.totalorder 1, %s19
    %p332 = scmp.lt.s32.totalorder %s19, 3
    %p333 = pnand %p331, %p332
    %p334 = pneg %p333
    // Predicated region
    $region9: #{dense_block_apply.1} parent=5 // pred_check
      _
    $region10: #{dense_block_apply.1} parent=5 // pred_check_branch
      %336 = sbr.rel (%p333) target = $region12
    $region11: #{dense_block_apply.1} parent=5 // pred_region
      %s337 = ssub.s32 %s19, 1
      // Predicated region
      $region13: #{dense_block_apply.1} parent=11 // pred_check
        %p338 = pneg %p66
      $region14: #{dense_block_apply.1} parent=11 // pred_check_branch
        %340 = sbr.rel (%p338) target = $region16
      $region15: #{dense_block_apply.1} parent=11 // pred_region
        _
      $region16: #{dense_block_apply.1} parent=11 // pred_fallthru
        _
      // Predicated region
      $region17: #{dense_block_apply.1} parent=11 // pred_check
        %p341 = pneg %p87
      $region18: #{dense_block_apply.1} parent=11 // pred_check_branch
        %343 = sbr.rel (%p341) target = $region20
      $region19: #{dense_block_apply.1} parent=11 // pred_region
        _
      $region20: #{dense_block_apply.1} parent=11 // pred_fallthru
        _
      // Predicated region
      $region21: #{dense_block_apply.1} parent=11 // pred_check
        %p344 = pneg %p108
      $region22: #{dense_block_apply.1} parent=11 // pred_check_branch
        %346 = sbr.rel (%p344) target = $region24
      $region23: #{dense_block_apply.1} parent=11 // pred_region
        _
      $region24: #{dense_block_apply.1} parent=11 // pred_fallthru
        _
      // Predicated region
      $region25: #{dense_block_apply.1} parent=11 // pred_check
        %p347 = pneg %p129
      $region26: #{dense_block_apply.1} parent=11 // pred_check_branch
        %349 = sbr.rel (%p347) target = $region28
      $region27: #{dense_block_apply.1} parent=11 // pred_region
        _
      $region28: #{dense_block_apply.1} parent=11 // pred_fallthru
        _
      // Predicated region
      $region29: #{dense_block_apply.1} parent=11 // pred_check
        %p350 = pneg %p150
      $region30: #{dense_block_apply.1} parent=11 // pred_check_branch
        %352 = sbr.rel (%p350) target = $region32
      $region31: #{dense_block_apply.1} parent=11 // pred_region
        _
      $region32: #{dense_block_apply.1} parent=11 // pred_fallthru
        _
      // Predicated region
      $region33: #{dense_block_apply.1} parent=11 // pred_check
        %p353 = pneg %p171
      $region34: #{dense_block_apply.1} parent=11 // pred_check_branch
        %355 = sbr.rel (%p353) target = $region36
      $region35: #{dense_block_apply.1} parent=11 // pred_region
        _
      $region36: #{dense_block_apply.1} parent=11 // pred_fallthru
        _
      // Predicated region
      $region37: #{dense_block_apply.1} parent=11 // pred_check
        %p356 = pneg %p192
      $region38: #{dense_block_apply.1} parent=11 // pred_check_branch
        %358 = sbr.rel (%p356) target = $region40
      $region39: #{dense_block_apply.1} parent=11 // pred_region
        _
      $region40: #{dense_block_apply.1} parent=11 // pred_fallthru
        _
      // Predicated region
      $region41: #{dense_block_apply.1} parent=11 // pred_check
        %p359 = pneg %p213
      $region42: #{dense_block_apply.1} parent=11 // pred_check_branch
        %361 = sbr.rel (%p359) target = $region44
      $region43: #{dense_block_apply.1} parent=11 // pred_region
        _
      $region44: #{dense_block_apply.1} parent=11 // pred_fallthru
        _
      // Predicated region
      $region45: #{dense_block_apply.1} parent=11 // pred_check
        %p362 = pneg %p234
      $region46: #{dense_block_apply.1} parent=11 // pred_check_branch
        %364 = sbr.rel (%p362) target = $region48
      $region47: #{dense_block_apply.1} parent=11 // pred_region
        _
      $region48: #{dense_block_apply.1} parent=11 // pred_fallthru
        _
      // Predicated region
      $region49: #{dense_block_apply.1} parent=11 // pred_check
        %p365 = pneg %p255
      $region50: #{dense_block_apply.1} parent=11 // pred_check_branch
        %367 = sbr.rel (%p365) target = $region52
      $region51: #{dense_block_apply.1} parent=11 // pred_region
        _
      $region52: #{dense_block_apply.1} parent=11 // pred_fallthru
        _
      // Predicated region
      $region53: #{dense_block_apply.1} parent=11 // pred_check
        %p368 = pneg %p276
      $region54: #{dense_block_apply.1} parent=11 // pred_check_branch
        %370 = sbr.rel (%p368) target = $region56
      $region55: #{dense_block_apply.1} parent=11 // pred_region
        _
      $region56: #{dense_block_apply.1} parent=11 // pred_fallthru
        _
      // Predicated region
      $region57: #{dense_block_apply.1} parent=11 // pred_check
        %p371 = pneg %p297
      $region58: #{dense_block_apply.1} parent=11 // pred_check_branch
        %373 = sbr.rel (%p371) target = $region60
      $region59: #{dense_block_apply.1} parent=11 // pred_region
        _
      $region60: #{dense_block_apply.1} parent=11 // pred_fallthru
        _
    $region12: #{dense_block_apply.1} parent=5 // pred_fallthru
      _
    %p374 = scmp.lt.s32.totalorder %s19, 2
    // Predicated region
    $region61: #{dense_block_apply.1} parent=5 // pred_check
      %p375 = pneg %p374
    $region62: #{dense_block_apply.1} parent=5 // pred_check_branch
      %377 = sbr.rel (%p375) target = $region64
    $region63: #{dense_block_apply.1} parent=5 // pred_region
      // Predicated region
      $region65: #{dense_block_apply.1} parent=63 // pred_check
        %p378 = pneg %p39
      $region66: #{dense_block_apply.1} parent=63 // pred_check_branch
        %380 = sbr.rel (%p378) target = $region68
      $region67: #{dense_block_apply.1} parent=63 // pred_region
        %p381 = scmp.lt.s32.totalorder %s19, 1
        %s382 = scalar_select %p381, %s19, 1
        %s383 = smul.addr %s382, 2
        %s384 = smul.addr %s383, 8
        %s385 = scalar_lea.vmem %s0, %s384
      $region68: #{dense_block_apply.1} parent=63 // pred_fallthru
        _
    $region64: #{dense_block_apply.1} parent=5 // pred_fallthru
      _
    %p386 = scmp.le.s32.totalorder 1, %s19
    %p387 = scmp.lt.s32.totalorder %s19, 3
    %p388 = pnand %p386, %p387
    %p389 = pneg %p388
    // Predicated region
    $region69: #{dense_block_apply.1} parent=5 // pred_check
      _
    $region70: #{dense_block_apply.1} parent=5 // pred_check_branch
      %391 = sbr.rel (%p388) target = $region72
    $region71: #{dense_block_apply.1} parent=5 // pred_region
      %s392 = ssub.s32 %s19, 1
      %p393 = scmp.lt.s32.totalorder %s24, 1
      %s394 = scalar_select %p393, %s24, 1
      %s395 = smul.addr %s394, 2
      %s396 = smul.addr %s395, 8
      %s397 = scalar_lea.vmem %s0, %s396
      %p398 = pneg %p45
      %p399 = pneg %p42
      %p400 = pneg %p66
      %p401 = pneg %p63
      %p402 = pneg %p87
      %p403 = pneg %p84
      %p404 = pneg %p108
      %p405 = pneg %p105
      %p406 = pneg %p129
      %p407 = pneg %p126
      %p408 = pneg %p150
      %p409 = pneg %p147
      %p410 = pneg %p171
      %p411 = pneg %p168
      %p412 = pneg %p192
      %p413 = pneg %p189
      %p414 = pneg %p213
      %p415 = pneg %p210
      %p416 = pneg %p234
      %p417 = pneg %p231
      %p418 = pneg %p255
      %p419 = pneg %p252
      %p420 = pneg %p276
      %p421 = pneg %p273
      %p422 = pneg %p297
      %p423 = pneg %p294
      %p424 = pneg %p323
      %p425 = pneg %p320
      %p426 = scmp.lt.s32.totalorder %s24, 1
      %s427 = scalar_select %p426, %s24, 1
      %s428 = smul.addr %s427, 6
      %s429 = smul.addr %s428, 8
      %s430 = scalar_lea.vmem %s13, %s429
      %p431 = scmp.lt.s32.totalorder %s24, 1
      %s432 = scalar_select %p431, %s24, 1
      %s433 = smul.addr %s432, 2
      %s434 = smul.addr %s433, 8
      %s435 = scalar_lea.vmem %s0, %s434
      %p436 = scmp.lt.s32.totalorder %s24, 1
      %s437 = scalar_select %p436, %s24, 1
      %s438 = smul.addr %s437, 6
      %s439 = smul.addr %s438, 8
      %s440 = scalar_lea.vmem %s13, %s439
      %v441 = vlaneseq
      %v442 = vand.u32 %v441, 127
      %v443 = vadd.s32 %v442, 128
      %vm444 = vcmp.lt.s32.totalorder %v442, 0
      %v445 = vsub.s32 0, %v442
      %v446 = vsel %vm444, %v445, %v442
      %v447 = vshrl.u32 %v446, 4
      %v448 = vand.u32 %v446, 15
      %v449 = vsub.s32 0, %v448
      %v450 = vsel %vm444, %v449, %v448
      %vm451 = vcmp.lt.s32.totalorder %v443, 0
      %v452 = vsub.s32 0, %v443
      %v453 = vsel %vm451, %v452, %v443
      %v454 = vshrl.u32 %v453, 4
      %v455 = vand.u32 %v453, 15
      %v456 = vsub.s32 0, %v455
      %v457 = vsel %vm451, %v456, %v455
      %vm458 = vcmp.ne.s32.totalorder %v450, 0
      %vm459 = vcmp.ne.s32.totalorder %v457, 0
      %vm460 = vcmp.lt.s32.totalorder %v450, 0
      %vm461 = vcmp.lt.s32.totalorder %v457, 0
      %vm462 = vmand %vm460, %vm458
      %vm463 = vmand %vm461, %vm459
      %v464 = vadd.s32 %v450, 16
      %v465 = vadd.s32 %v457, 16
      %v466 = vsel %vm462, %v464, %v450
      %v467 = vsel %vm463, %v465, %v457
      %vm468 = vcmp.ne.s32.totalorder %v466, 15
      %vm469 = vcmp.ne.s32.totalorder %v467, 15
      %vm470 = vcmp.ne.s32.totalorder %v466, 0
      %vm471 = vcmp.ne.s32.totalorder %v467, 0
      %vm472 = vcmask 138240
      %473 = vst.msk [vmem:[#allocation2 + $0x8] sm:$0xff] %vm472, 0.0
      %474 = vst.msk [vmem:[#allocation2 + $0x28] sm:$0xff] %vm472, 0.0
      %475 = vst.msk [vmem:[#allocation2 + $0x48] sm:$0xff] %vm472, 0.0
      %476 = vst.msk [vmem:[#allocation2 + $0x68] sm:$0xff] %vm472, 0.0
      %477 = vst.msk [vmem:[#allocation2 + $0x88] sm:$0xff] %vm472, 0.0
      %478 = vst.msk [vmem:[#allocation2 + $0xa8] sm:$0xff] %vm472, 0.0
      %479 = vst.msk [vmem:[#allocation2 + $0xc8] sm:$0xff] %vm472, 0.0
      %480 = vst.msk [vmem:[#allocation2 + $0xe8] sm:$0xff] %vm472, 0.0
      %481 = vst.msk [vmem:[#allocation2 + $0x108] sm:$0xff] %vm472, 0.0
      %482 = vst.msk [vmem:[#allocation2 + $0x128] sm:$0xff] %vm472, 0.0
      %483 = vst.msk [vmem:[#allocation2 + $0x148] sm:$0xff] %vm472, 0.0
      %484 = vst.msk [vmem:[#allocation2 + $0x168] sm:$0xff] %vm472, 0.0
      %485 = vst.msk [vmem:[#allocation2 + $0x188] sm:$0xff] %vm472, 0.0
      %486 = vst.msk [vmem:[#allocation2 + $0x1a8] sm:$0xff] %vm472, 0.0
      %487 = vst.msk [vmem:[#allocation2 + $0x1c8] sm:$0xff] %vm472, 0.0
      %488 = vst.msk [vmem:[#allocation2 + $0x1e8] sm:$0xff] %vm472, 0.0
      %489 = vst.msk [vmem:[#allocation2 + $0x208] sm:$0xff] %vm472, 0.0
      %490 = vst.msk [vmem:[#allocation2 + $0x228] sm:$0xff] %vm472, 0.0
      %vm491 = vcmask 1048440
      %492 = vst.msk [vmem:[#allocation2 + $0x10] sm:$0xff] %vm491, 0.0
      %493 = vst.msk [vmem:[#allocation2 + $0x30] sm:$0xff] %vm491, 0.0
      %494 = vst.msk [vmem:[#allocation2 + $0x50] sm:$0xff] %vm491, 0.0
      %495 = vst.msk [vmem:[#allocation2 + $0x70] sm:$0xff] %vm491, 0.0
      %496 = vst.msk [vmem:[#allocation2 + $0x90] sm:$0xff] %vm491, 0.0
      %497 = vst.msk [vmem:[#allocation2 + $0xb0] sm:$0xff] %vm491, 0.0
      %498 = vst.msk [vmem:[#allocation2 + $0xd0] sm:$0xff] %vm491, 0.0
      %499 = vst.msk [vmem:[#allocation2 + $0xf0] sm:$0xff] %vm491, 0.0
      %500 = vst.msk [vmem:[#allocation2 + $0x110] sm:$0xff] %vm491, 0.0
      %501 = vst.msk [vmem:[#allocation2 + $0x130] sm:$0xff] %vm491, 0.0
      %502 = vst.msk [vmem:[#allocation2 + $0x150] sm:$0xff] %vm491, 0.0
      %503 = vst.msk [vmem:[#allocation2 + $0x170] sm:$0xff] %vm491, 0.0
      %504 = vst.msk [vmem:[#allocation2 + $0x190] sm:$0xff] %vm491, 0.0
      %505 = vst.msk [vmem:[#allocation2 + $0x1b0] sm:$0xff] %vm491, 0.0
      %506 = vst.msk [vmem:[#allocation2 + $0x1d0] sm:$0xff] %vm491, 0.0
      %507 = vst.msk [vmem:[#allocation2 + $0x1f0] sm:$0xff] %vm491, 0.0
      %508 = vst.msk [vmem:[#allocation2 + $0x210] sm:$0xff] %vm491, 0.0
      %509 = vst.msk [vmem:[#allocation2 + $0x230] sm:$0xff] %vm491, 0.0
      %510 = vst.msk [vmem:[#allocation3 + $0x8] sm:$0xff] %vm472, 0.0
      %511 = vst.msk [vmem:[#allocation3 + $0x28] sm:$0xff] %vm472, 0.0
      %512 = vst.msk [vmem:[#allocation3 + $0x48] sm:$0xff] %vm472, 0.0
      %513 = vst.msk [vmem:[#allocation3 + $0x68] sm:$0xff] %vm472, 0.0
      %514 = vst.msk [vmem:[#allocation3 + $0x88] sm:$0xff] %vm472, 0.0
      %515 = vst.msk [vmem:[#allocation3 + $0xa8] sm:$0xff] %vm472, 0.0
      %516 = vst.msk [vmem:[#allocation3 + $0xc8] sm:$0xff] %vm472, 0.0
      %517 = vst.msk [vmem:[#allocation3 + $0xe8] sm:$0xff] %vm472, 0.0
      %518 = vst.msk [vmem:[#allocation3 + $0x108] sm:$0xff] %vm472, 0.0
      %519 = vst.msk [vmem:[#allocation3 + $0x10] sm:$0xff] %vm491, 0.0
      %520 = vst.msk [vmem:[#allocation3 + $0x30] sm:$0xff] %vm491, 0.0
      %521 = vst.msk [vmem:[#allocation3 + $0x50] sm:$0xff] %vm491, 0.0
      %522 = vst.msk [vmem:[#allocation3 + $0x70] sm:$0xff] %vm491, 0.0
      %523 = vst.msk [vmem:[#allocation3 + $0x90] sm:$0xff] %vm491, 0.0
      %524 = vst.msk [vmem:[#allocation3 + $0xb0] sm:$0xff] %vm491, 0.0
      %525 = vst.msk [vmem:[#allocation3 + $0xd0] sm:$0xff] %vm491, 0.0
      %526 = vst.msk [vmem:[#allocation3 + $0xf0] sm:$0xff] %vm491, 0.0
      %527 = vst.msk [vmem:[#allocation3 + $0x110] sm:$0xff] %vm491, 0.0
      %v528 = vld [vmem:[%s435] sm:$0xff]
      %v529 = vld [vmem:[%s435 + $0x8] sm:$0xff]
      %530 = vst [vmem:[%s440] sm:$0xff] %v528
      %531 = vst [vmem:[%s440 + $0x8] sm:$0xff] %v529
      %v532 = vld [vmem:[%s1] sm:$0xff]
      %v533 = vld [vmem:[%s1 + $0x8] sm:$0xff]
      %v534 = vld [vmem:[%s440] sm:$0xff]
      %v535 = vld [vmem:[%s440 + $0x8] sm:$0xff]
      %v536 = vld [vmem:[%s2] sm:$0xff]
      %v537 = vld [vmem:[%s2 + $0x8] sm:$0xff]
      %539 = vset.pattern.permute.xlu0 0
      %540 = vperm.xlu0 %539, %v536
      %v541 = vpop.permute.xlu0 %540
      %544 = vset.pattern.permute.xlu0 0
      %545 = vperm.xlu0 %544, %v537
      %v546 = vpop.permute.xlu0 %545
      %vm548 = vcmask 64512
      %v550 = vsel %vm548, %v532, 0
      %v553 = vsel %vm548, %v533, 0
      %555 = vmatprep.subr.mxu0 0.0
      %556 = vmatpush1.msra.mxu0 0.0
      %557 = vmatprep.subr.mxu0 0.0
      %558 = vmatpush1.msra.mxu0 0.0
      %559 = vmatprep.subr.mxu0 0.0
      %560 = vmatpush1.msra.mxu0 0.0
      %561 = vmatprep.subr.mxu0 0.0
      %562 = vmatpush1.msra.mxu0 0.0
      %563 = vmatprep.subr.mxu0 0.0
      %564 = vmatpush1.msra.mxu0 0.0
      %565 = vmatprep.subr.mxu0 0.0
      %566 = vmatpush1.msra.mxu0 0.0
      %567 = vmatprep.subr.mxu0 0.0
      %568 = vmatpush1.msra.mxu0 0.0
      %569 = vmatprep.subr.mxu0 0.0
      %570 = vmatpush1.msra.mxu0 0.0
      %571 = vmatprep.subr.mxu0 0.0
      %572 = vmatpush1.msra.mxu0 0.0
      %573 = vmatprep.subr.mxu0 0.0
      %574 = vmatpush1.msra.mxu0 0.0
      %575 = vmatprep.subr.mxu0 0.0
      %576 = vmatpush1.msra.mxu0 0.0
      %577 = vmatprep.subr.mxu0 0.0
      %578 = vmatpush1.msra.mxu0 0.0
      %579 = vmatprep.subr.mxu0 0.0
      %580 = vmatpush1.msra.mxu0 0.0
      %581 = vmatprep.subr.mxu0 0.0
      %582 = vmatpush1.msra.mxu0 0.0
      %583 = vmatprep.subr.mxu0 0.0
      %584 = vmatpush1.msra.mxu0 0.0
      %585 = vmatprep.subr.mxu0 %v535
      %586 = vmatpush1.msra.mxu0 %v534
      %587 = vmatprep.subr.mxu0 0.0
      %588 = vmatpush2.msra.mxu0 0.0
      %589 = vmatprep.subr.mxu0 0.0
      %590 = vmatpush2.msra.mxu0 0.0
      %591 = vmatprep.subr.mxu0 0.0
      %592 = vmatpush2.msra.mxu0 0.0
      %593 = vmatprep.subr.mxu0 0.0
      %594 = vmatpush2.msra.mxu0 0.0
      %595 = vmatprep.subr.mxu0 0.0
      %596 = vmatpush2.msra.mxu0 0.0
      %597 = vmatprep.subr.mxu0 0.0
      %598 = vmatpush2.msra.mxu0 0.0
      %599 = vmatprep.subr.mxu0 0.0
      %600 = vmatpush2.msra.mxu0 0.0
      %601 = vmatprep.subr.mxu0 0.0
      %602 = vmatpush2.msra.mxu0 0.0
      %603 = vmatprep.subr.mxu0 0.0
      %604 = vmatpush2.msra.mxu0 0.0
      %605 = vmatprep.subr.mxu0 0.0
      %606 = vmatpush2.msra.mxu0 0.0
      %607 = vmatprep.subr.mxu0 0.0
      %608 = vmatpush2.msra.mxu0 0.0
      %609 = vmatprep.subr.mxu0 0.0
      %610 = vmatpush2.msra.mxu0 0.0
      %611 = vmatprep.subr.mxu0 0.0
      %612 = vmatpush2.msra.mxu0 0.0
      %613 = vmatprep.subr.mxu0 0.0
      %614 = vmatpush2.msra.mxu0 0.0
      %615 = vmatprep.subr.mxu0 0.0
      %616 = vmatpush2.msra.mxu0 0.0
      %617 = vmatprep.subr.mxu0 0.0
      %618 = vmatpush2.msra.mxu0 0.0
      %619 = vmatprep.mubr.f32.mxu0 0.0
      %620 = vmatmul.mubr.f32.gmra.mxu0 %v550
      %v621 = vpop.f32.mrf.mxu0
      %v622 = vadd.f32 %v541, %v621
      %v623 = vpop.f32.mrf.mxu0
      %v624 = vadd.f32 %v541, %v623
      %625 = vmatprep.mubr.f32.mxu0 0.0
      %626 = vmatmul.mubr.f32.gmra.mxu0 %v553
      %v627 = vpop.f32.mrf.mxu0
      %v628 = vadd.f32 %v546, %v627
      %v629 = vpop.f32.mrf.mxu0
      %v630 = vadd.f32 %v546, %v629
      %631 = vdwg.mxu0
      %v632 = vmax.f32 %v622, 0.0
      %v633 = vmax.f32 %v624, 0.0
      %v634 = vmax.f32 %v628, 0.0
      %v635 = vmax.f32 %v630, 0.0
      %v636 = vsel %vm468, 1, 0
      %v637 = vsel %vm469, 1, 0
      %vm638 = vcmp.eq.s32.totalorder %v636, 1
      %vm639 = vcmp.eq.s32.totalorder %v637, 1
      %v640 = vsel %vm638, %v632, 0.0
      %v641 = vsel %vm639, %v633, 0.0
      %v642 = vsel %vm638, %v634, 0.0
      %v643 = vsel %vm639, %v635, 0.0
      %v644 = vsel %vm470, 1, 0
      %v645 = vsel %vm471, 1, 0
      %vm646 = vcmp.eq.s32.totalorder %v644, 1
      %vm647 = vcmp.eq.s32.totalorder %v645, 1
      %v648 = vsel %vm646, %v632, 0.0
      %v649 = vsel %vm647, %v633, 0.0
      %v650 = vsel %vm646, %v634, 0.0
      %v651 = vsel %vm647, %v635, 0.0
      %656 = vrot.lane.b32.xlu0 %v640, 17
      %v657 = vpop.permute.xlu0 %656
      %658 = vrot.lane.b32.xlu0 %v641, 17
      %v659 = vpop.permute.xlu0 %658
      %660 = vrot.lane.b32.xlu0 %v642, 17
      %v661 = vpop.permute.xlu0 %660
      %662 = vrot.lane.b32.xlu0 %v643, 17
      %v663 = vpop.permute.xlu0 %662
      %v664 = vsel %vm472, %v657, %v659
      %v665 = vsel %vm472, %v661, %v663
      %vm672 = vcmask 1047688
      %673 = vst.msk [vmem:[#allocation2 + $0x8] sm:$0xff] %vm672, %v657
      %674 = vst [vmem:[#allocation2 + $0x10] sm:$0xff] %v664
      %675 = vst.msk [vmem:[#allocation2 + $0x18] sm:$0xff] %vm472, %v659
      %676 = vst.msk [vmem:[#allocation2 + $0x28] sm:$0xff] %vm672, %v661
      %677 = vst [vmem:[#allocation2 + $0x30] sm:$0xff] %v665
      %678 = vst.msk [vmem:[#allocation2 + $0x38] sm:$0xff] %vm472, %v663
      %683 = vrot.lane.b32.xlu0 %v632, 16
      %v684 = vpop.permute.xlu0 %683
      %685 = vrot.lane.b32.xlu0 %v633, 16
      %v686 = vpop.permute.xlu0 %685
      %687 = vrot.lane.b32.xlu0 %v634, 16
      %v688 = vpop.permute.xlu0 %687
      %689 = vrot.lane.b32.xlu0 %v635, 16
      %v690 = vpop.permute.xlu0 %689
      %vm691 = vcmask 130048
      %v692 = vsel %vm691, %v684, %v686
      %v693 = vsel %vm691, %v688, %v690
      %vm700 = vcmask 1047680
      %701 = vst.msk [vmem:[#allocation2 + $0x48] sm:$0xff] %vm700, %v684
      %702 = vst [vmem:[#allocation2 + $0x50] sm:$0xff] %v692
      %703 = vst.msk [vmem:[#allocation2 + $0x58] sm:$0xff] %vm691, %v686
      %704 = vst.msk [vmem:[#allocation2 + $0x68] sm:$0xff] %vm700, %v688
      %705 = vst [vmem:[#allocation2 + $0x70] sm:$0xff] %v693
      %706 = vst.msk [vmem:[#allocation2 + $0x78] sm:$0xff] %vm691, %v690
      %711 = vrot.lane.b32.xlu0 %v648, 15
      %v712 = vpop.permute.xlu0 %711
      %713 = vrot.lane.b32.xlu0 %v649, 15
      %v714 = vpop.permute.xlu0 %713
      %715 = vrot.lane.b32.xlu0 %v650, 15
      %v716 = vpop.permute.xlu0 %715
      %717 = vrot.lane.b32.xlu0 %v651, 15
      %v718 = vpop.permute.xlu0 %717
      %vm719 = vcmask 121856
      %v720 = vsel %vm719, %v712, %v714
      %v721 = vsel %vm719, %v716, %v718
      %vm728 = vcmask 1047672
      %729 = vst.msk [vmem:[#allocation2 + $0x88] sm:$0xff] %vm728, %v712
      %730 = vst [vmem:[#allocation2 + $0x90] sm:$0xff] %v720
      %731 = vst.msk [vmem:[#allocation2 + $0x98] sm:$0xff] %vm719, %v714
      %732 = vst.msk [vmem:[#allocation2 + $0xa8] sm:$0xff] %vm728, %v716
      %733 = vst [vmem:[#allocation2 + $0xb0] sm:$0xff] %v721
      %734 = vst.msk [vmem:[#allocation2 + $0xb8] sm:$0xff] %vm719, %v718
      %735 = vrot.lane.b32.xlu0 %v640, 1
      %v736 = vpop.permute.xlu0 %735
      %737 = vrot.lane.b32.xlu0 %v641, 1
      %v738 = vpop.permute.xlu0 %737
      %739 = vrot.lane.b32.xlu0 %v642, 1
      %v740 = vpop.permute.xlu0 %739
      %741 = vrot.lane.b32.xlu0 %v643, 1
      %v742 = vpop.permute.xlu0 %741
      %vm743 = vcmask 7168
      %v744 = vsel %vm743, %v736, %v738
      %v745 = vsel %vm743, %v740, %v742
      %vm752 = vcmask 1047560
      %753 = vst.msk [vmem:[#allocation2 + $0xc8] sm:$0xff] %vm752, %v736
      %754 = vst [vmem:[#allocation2 + $0xd0] sm:$0xff] %v744
      %755 = vst.msk [vmem:[#allocation2 + $0xd8] sm:$0xff] %vm743, %v738
      %756 = vst.msk [vmem:[#allocation2 + $0xe8] sm:$0xff] %vm752, %v740
      %757 = vst [vmem:[#allocation2 + $0xf0] sm:$0xff] %v745
      %758 = vst.msk [vmem:[#allocation2 + $0xf8] sm:$0xff] %vm743, %v742
      %759 = vst [vmem:[#allocation2 + $0x108] sm:$0xff] %v632
      %760 = vst [vmem:[#allocation2 + $0x110] sm:$0xff] %v633
      %761 = vst [vmem:[#allocation2 + $0x128] sm:$0xff] %v634
      %762 = vst [vmem:[#allocation2 + $0x130] sm:$0xff] %v635
      %763 = vrot.lane.b32.xlu0 %v648, 127
      %v764 = vpop.permute.xlu0 %763
      %765 = vrot.lane.b32.xlu0 %v649, 127
      %v766 = vpop.permute.xlu0 %765
      %767 = vrot.lane.b32.xlu0 %v650, 127
      %v768 = vpop.permute.xlu0 %767
      %769 = vrot.lane.b32.xlu0 %v651, 127
      %v770 = vpop.permute.xlu0 %769
      %vm771 = vcmask 1039360
      %v772 = vsel %vm771, %v764, %v766
      %v773 = vsel %vm771, %v768, %v770
      %vm780 = vcmask 1048568
      %781 = vst.msk [vmem:[#allocation2 + $0x140] sm:$0xff] %vm780, %v764
      %782 = vst [vmem:[#allocation2 + $0x148] sm:$0xff] %v772
      %783 = vst.msk [vmem:[#allocation2 + $0x150] sm:$0xff] %vm771, %v766
      %784 = vst.msk [vmem:[#allocation2 + $0x160] sm:$0xff] %vm780, %v768
      %785 = vst [vmem:[#allocation2 + $0x168] sm:$0xff] %v773
      %786 = vst.msk [vmem:[#allocation2 + $0x170] sm:$0xff] %vm771, %v770
      %787 = vrot.lane.b32.xlu0 %v640, 113
      %v788 = vpop.permute.xlu0 %787
      %789 = vrot.lane.b32.xlu0 %v641, 113
      %v790 = vpop.permute.xlu0 %789
      %791 = vrot.lane.b32.xlu0 %v642, 113
      %v792 = vpop.permute.xlu0 %791
      %793 = vrot.lane.b32.xlu0 %v643, 113
      %v794 = vpop.permute.xlu0 %793
      %vm795 = vcmask 924672
      %v796 = vsel %vm795, %v788, %v790
      %v797 = vsel %vm795, %v792, %v794
      %vm804 = vcmask 1048456
      %805 = vst.msk [vmem:[#allocation2 + $0x180] sm:$0xff] %vm804, %v788
      %806 = vst [vmem:[#allocation2 + $0x188] sm:$0xff] %v796
      %807 = vst.msk [vmem:[#allocation2 + $0x190] sm:$0xff] %vm795, %v790
      %808 = vst.msk [vmem:[#allocation2 + $0x1a0] sm:$0xff] %vm804, %v792
      %809 = vst [vmem:[#allocation2 + $0x1a8] sm:$0xff] %v797
      %810 = vst.msk [vmem:[#allocation2 + $0x1b0] sm:$0xff] %vm795, %v794
      %811 = vrot.lane.b32.xlu0 %v632, 112
      %v812 = vpop.permute.xlu0 %811
      %813 = vrot.lane.b32.xlu0 %v633, 112
      %v814 = vpop.permute.xlu0 %813
      %815 = vrot.lane.b32.xlu0 %v634, 112
      %v816 = vpop.permute.xlu0 %815
      %817 = vrot.lane.b32.xlu0 %v635, 112
      %v818 = vpop.permute.xlu0 %817
      %vm819 = vcmask 916480
      %v820 = vsel %vm819, %v812, %v814
      %v821 = vsel %vm819, %v816, %v818
      %vm828 = vcmask 1048448
      %829 = vst.msk [vmem:[#allocation2 + $0x1c0] sm:$0xff] %vm828, %v812
      %830 = vst [vmem:[#allocation2 + $0x1c8] sm:$0xff] %v820
      %831 = vst.msk [vmem:[#allocation2 + $0x1d0] sm:$0xff] %vm819, %v814
      %832 = vst.msk [vmem:[#allocation2 + $0x1e0] sm:$0xff] %vm828, %v816
      %833 = vst [vmem:[#allocation2 + $0x1e8] sm:$0xff] %v821
      %834 = vst.msk [vmem:[#allocation2 + $0x1f0] sm:$0xff] %vm819, %v818
      %835 = vrot.lane.b32.xlu0 %v648, 111
      %v836 = vpop.permute.xlu0 %835
      %837 = vrot.lane.b32.xlu0 %v649, 111
      %v838 = vpop.permute.xlu0 %837
      %839 = vrot.lane.b32.xlu0 %v650, 111
      %v840 = vpop.permute.xlu0 %839
      %841 = vrot.lane.b32.xlu0 %v651, 111
      %v842 = vpop.permute.xlu0 %841
      %vm843 = vcmask 908288
      %v844 = vsel %vm843, %v836, %v838
      %v845 = vsel %vm843, %v840, %v842
      %852 = vst.msk [vmem:[#allocation2 + $0x200] sm:$0xff] %vm491, %v836
      %853 = vst [vmem:[#allocation2 + $0x208] sm:$0xff] %v844
      %854 = vst.msk [vmem:[#allocation2 + $0x210] sm:$0xff] %vm843, %v838
      %855 = vst.msk [vmem:[#allocation2 + $0x220] sm:$0xff] %vm491, %v840
      %856 = vst [vmem:[#allocation2 + $0x228] sm:$0xff] %v845
      %857 = vst.msk [vmem:[#allocation2 + $0x230] sm:$0xff] %vm843, %v842
      %v858 = vld [vmem:[%s3] sm:$0xff]
      %v859 = vld [vmem:[%s3 + $0x8] sm:$0xff]
      %v860 = vld [vmem:[#allocation2 + $0x8] sm:$0xff]
      %v861 = vld [vmem:[#allocation2 + $0x10] sm:$0xff]
      %v862 = vld [vmem:[#allocation2 + $0x28] sm:$0xff]
      %v863 = vld [vmem:[#allocation2 + $0x30] sm:$0xff]
      %v864 = vld [vmem:[#allocation2 + $0x48] sm:$0xff]
      %v865 = vld [vmem:[#allocation2 + $0x50] sm:$0xff]
      %v866 = vld [vmem:[#allocation2 + $0x68] sm:$0xff]
      %v867 = vld [vmem:[#allocation2 + $0x70] sm:$0xff]
      %v868 = vld [vmem:[#allocation2 + $0x88] sm:$0xff]
      %v869 = vld [vmem:[#allocation2 + $0x90] sm:$0xff]
      %v870 = vld [vmem:[#allocation2 + $0xa8] sm:$0xff]
      %v871 = vld [vmem:[#allocation2 + $0xb0] sm:$0xff]
      %v872 = vld [vmem:[#allocation2 + $0xc8] sm:$0xff]
      %v873 = vld [vmem:[#allocation2 + $0xd0] sm:$0xff]
      %v874 = vld [vmem:[#allocation2 + $0xe8] sm:$0xff]
      %v875 = vld [vmem:[#allocation2 + $0xf0] sm:$0xff]
      %v876 = vld [vmem:[#allocation2 + $0x108] sm:$0xff]
      %v877 = vld [vmem:[#allocation2 + $0x110] sm:$0xff]
      %v878 = vld [vmem:[#allocation2 + $0x128] sm:$0xff]
      %v879 = vld [vmem:[#allocation2 + $0x130] sm:$0xff]
      %v880 = vld [vmem:[#allocation2 + $0x148] sm:$0xff]
      %v881 = vld [vmem:[#allocation2 + $0x150] sm:$0xff]
      %v882 = vld [vmem:[#allocation2 + $0x168] sm:$0xff]
      %v883 = vld [vmem:[#allocation2 + $0x170] sm:$0xff]
      %v884 = vld [vmem:[#allocation2 + $0x188] sm:$0xff]
      %v885 = vld [vmem:[#allocation2 + $0x190] sm:$0xff]
      %v886 = vld [vmem:[#allocation2 + $0x1a8] sm:$0xff]
      %v887 = vld [vmem:[#allocation2 + $0x1b0] sm:$0xff]
      %v888 = vld [vmem:[#allocation2 + $0x1c8] sm:$0xff]
      %v889 = vld [vmem:[#allocation2 + $0x1d0] sm:$0xff]
      %v890 = vld [vmem:[#allocation2 + $0x1e8] sm:$0xff]
      %v891 = vld [vmem:[#allocation2 + $0x1f0] sm:$0xff]
      %v892 = vld [vmem:[#allocation2 + $0x208] sm:$0xff]
      %v893 = vld [vmem:[#allocation2 + $0x210] sm:$0xff]
      %v894 = vld [vmem:[#allocation2 + $0x228] sm:$0xff]
      %v895 = vld [vmem:[#allocation2 + $0x230] sm:$0xff]
      %v896 = vld [vmem:[%s4] sm:$0xff]
      %898 = vset.pattern.permute.xlu0 0
      %899 = vperm.xlu0 %898, %v896
      %v900 = vpop.permute.xlu0 %899
      %v903 = vsel %vm691, %v859, 0
      %905 = vmatprep.subr.mxu0 %v891
      %906 = vmatpush1.msra.mxu0 %v890
      %907 = vmatprep.subr.mxu0 %v889
      %908 = vmatpush1.msra.mxu0 %v888
      %909 = vmatprep.subr.mxu0 %v887
      %910 = vmatpush1.msra.mxu0 %v886
      %911 = vmatprep.subr.mxu0 %v885
      %912 = vmatpush1.msra.mxu0 %v884
      %913 = vmatprep.subr.mxu0 %v883
      %914 = vmatpush1.msra.mxu0 %v882
      %915 = vmatprep.subr.mxu0 %v881
      %916 = vmatpush1.msra.mxu0 %v880
      %917 = vmatprep.subr.mxu0 %v879
      %918 = vmatpush1.msra.mxu0 %v878
      %919 = vmatprep.subr.mxu0 %v877
      %920 = vmatpush1.msra.mxu0 %v876
      %921 = vmatprep.subr.mxu0 %v875
      %922 = vmatpush1.msra.mxu0 %v874
      %923 = vmatprep.subr.mxu0 %v873
      %924 = vmatpush1.msra.mxu0 %v872
      %925 = vmatprep.subr.mxu0 %v871
      %926 = vmatpush1.msra.mxu0 %v870
      %927 = vmatprep.subr.mxu0 %v869
      %928 = vmatpush1.msra.mxu0 %v868
      %929 = vmatprep.subr.mxu0 %v867
      %930 = vmatpush1.msra.mxu0 %v866
      %931 = vmatprep.subr.mxu0 %v865
      %932 = vmatpush1.msra.mxu0 %v864
      %933 = vmatprep.subr.mxu0 %v863
      %934 = vmatpush1.msra.mxu0 %v862
      %935 = vmatprep.subr.mxu0 %v861
      %936 = vmatpush1.msra.mxu0 %v860
      %937 = vmatprep.subr.mxu0 0.0
      %938 = vmatpush2.msra.mxu0 0.0
      %939 = vmatprep.subr.mxu0 0.0
      %940 = vmatpush2.msra.mxu0 0.0
      %941 = vmatprep.subr.mxu0 0.0
      %942 = vmatpush2.msra.mxu0 0.0
      %943 = vmatprep.subr.mxu0 0.0
      %944 = vmatpush2.msra.mxu0 0.0
      %945 = vmatprep.subr.mxu0 0.0
      %946 = vmatpush2.msra.mxu0 0.0
      %947 = vmatprep.subr.mxu0 0.0
      %948 = vmatpush2.msra.mxu0 0.0
      %949 = vmatprep.subr.mxu0 0.0
      %950 = vmatpush2.msra.mxu0 0.0
      %951 = vmatprep.subr.mxu0 0.0
      %952 = vmatpush2.msra.mxu0 0.0
      %953 = vmatprep.subr.mxu0 0.0
      %954 = vmatpush2.msra.mxu0 0.0
      %955 = vmatprep.subr.mxu0 0.0
      %956 = vmatpush2.msra.mxu0 0.0
      %957 = vmatprep.subr.mxu0 0.0
      %958 = vmatpush2.msra.mxu0 0.0
      %959 = vmatprep.subr.mxu0 0.0
      %960 = vmatpush2.msra.mxu0 0.0
      %961 = vmatprep.subr.mxu0 0.0
      %962 = vmatpush2.msra.mxu0 0.0
      %963 = vmatprep.subr.mxu0 0.0
      %964 = vmatpush2.msra.mxu0 0.0
      %965 = vmatprep.subr.mxu0 %v895
      %966 = vmatpush2.msra.mxu0 %v894
      %967 = vmatprep.subr.mxu0 %v893
      %968 = vmatpush2.msra.mxu0 %v892
      %969 = vmatprep.mubr.f32.mxu0 %v903
      %970 = vmatmul.mubr.f32.gmra.mxu0 %v858
      %v971 = vpop.f32.mrf.mxu0
      %v972 = vadd.f32 %v900, %v971
      %v973 = vpop.f32.mrf.mxu0
      %v974 = vadd.f32 %v900, %v973
      %975 = vdwg.mxu0
      %v976 = vmax.f32 %v972, 0.0
      %v977 = vmax.f32 %v974, 0.0
      %v978 = vsel %vm638, %v976, 0.0
      %v979 = vsel %vm639, %v977, 0.0
      %v980 = vsel %vm646, %v976, 0.0
      %v981 = vsel %vm647, %v977, 0.0
      %984 = vrot.lane.b32.xlu0 %v978, 17
      %v985 = vpop.permute.xlu0 %984
      %986 = vrot.lane.b32.xlu0 %v979, 17
      %v987 = vpop.permute.xlu0 %986
      %v988 = vsel %vm472, %v985, %v987
      %992 = vst.msk [vmem:[#allocation3 + $0x8] sm:$0xff] %vm672, %v985
      %993 = vst [vmem:[#allocation3 + $0x10] sm:$0xff] %v988
      %994 = vst.msk [vmem:[#allocation3 + $0x18] sm:$0xff] %vm472, %v987
      %997 = vrot.lane.b32.xlu0 %v976, 16
      %v998 = vpop.permute.xlu0 %997
      %999 = vrot.lane.b32.xlu0 %v977, 16
      %v1000 = vpop.permute.xlu0 %999
      %v1001 = vsel %vm691, %v998, %v1000
      %1005 = vst.msk [vmem:[#allocation3 + $0x28] sm:$0xff] %vm700, %v998
      %1006 = vst [vmem:[#allocation3 + $0x30] sm:$0xff] %v1001
      %1007 = vst.msk [vmem:[#allocation3 + $0x38] sm:$0xff] %vm691, %v1000
      %1010 = vrot.lane.b32.xlu0 %v980, 15
      %v1011 = vpop.permute.xlu0 %1010
      %1012 = vrot.lane.b32.xlu0 %v981, 15
      %v1013 = vpop.permute.xlu0 %1012
      %v1014 = vsel %vm719, %v1011, %v1013
      %1018 = vst.msk [vmem:[#allocation3 + $0x48] sm:$0xff] %vm728, %v1011
      %1019 = vst [vmem:[#allocation3 + $0x50] sm:$0xff] %v1014
      %1020 = vst.msk [vmem:[#allocation3 + $0x58] sm:$0xff] %vm719, %v1013
      %1021 = vrot.lane.b32.xlu0 %v978, 1
      %v1022 = vpop.permute.xlu0 %1021
      %1023 = vrot.lane.b32.xlu0 %v979, 1
      %v1024 = vpop.permute.xlu0 %1023
      %v1025 = vsel %vm743, %v1022, %v1024
      %1029 = vst.msk [vmem:[#allocation3 + $0x68] sm:$0xff] %vm752, %v1022
      %1030 = vst [vmem:[#allocation3 + $0x70] sm:$0xff] %v1025
      %1031 = vst.msk [vmem:[#allocation3 + $0x78] sm:$0xff] %vm743, %v1024
      %1032 = vst [vmem:[#allocation3 + $0x88] sm:$0xff] %v976
      %1033 = vst [vmem:[#allocation3 + $0x90] sm:$0xff] %v977
      %1034 = vrot.lane.b32.xlu0 %v980, 127
      %v1035 = vpop.permute.xlu0 %1034
      %1036 = vrot.lane.b32.xlu0 %v981, 127
      %v1037 = vpop.permute.xlu0 %1036
      %v1038 = vsel %vm771, %v1035, %v1037
      %1042 = vst.msk [vmem:[#allocation3 + $0xa0] sm:$0xff] %vm780, %v1035
      %1043 = vst [vmem:[#allocation3 + $0xa8] sm:$0xff] %v1038
      %1044 = vst.msk [vmem:[#allocation3 + $0xb0] sm:$0xff] %vm771, %v1037
      %1045 = vrot.lane.b32.xlu0 %v978, 113
      %v1046 = vpop.permute.xlu0 %1045
      %1047 = vrot.lane.b32.xlu0 %v979, 113
      %v1048 = vpop.permute.xlu0 %1047
      %v1049 = vsel %vm795, %v1046, %v1048
      %1053 = vst.msk [vmem:[#allocation3 + $0xc0] sm:$0xff] %vm804, %v1046
      %1054 = vst [vmem:[#allocation3 + $0xc8] sm:$0xff] %v1049
      %1055 = vst.msk [vmem:[#allocation3 + $0xd0] sm:$0xff] %vm795, %v1048
      %1056 = vrot.lane.b32.xlu0 %v976, 112
      %v1057 = vpop.permute.xlu0 %1056
      %1058 = vrot.lane.b32.xlu0 %v977, 112
      %v1059 = vpop.permute.xlu0 %1058
      %v1060 = vsel %vm819, %v1057, %v1059
      %1064 = vst.msk [vmem:[#allocation3 + $0xe0] sm:$0xff] %vm828, %v1057
      %1065 = vst [vmem:[#allocation3 + $0xe8] sm:$0xff] %v1060
      %1066 = vst.msk [vmem:[#allocation3 + $0xf0] sm:$0xff] %vm819, %v1059
      %1067 = vrot.lane.b32.xlu0 %v980, 111
      %v1068 = vpop.permute.xlu0 %1067
      %1069 = vrot.lane.b32.xlu0 %v981, 111
      %v1070 = vpop.permute.xlu0 %1069
      %v1071 = vsel %vm843, %v1068, %v1070
      %1075 = vst.msk [vmem:[#allocation3 + $0x100] sm:$0xff] %vm491, %v1068
      %1076 = vst [vmem:[#allocation3 + $0x108] sm:$0xff] %v1071
      %1077 = vst.msk [vmem:[#allocation3 + $0x110] sm:$0xff] %vm843, %v1070
      %v1078 = vld [vmem:[%s5] sm:$0xff]
      %v1079 = vld [vmem:[#allocation3 + $0x8] sm:$0xff]
      %v1080 = vld [vmem:[#allocation3 + $0x10] sm:$0xff]
      %v1081 = vld [vmem:[#allocation3 + $0x28] sm:$0xff]
      %v1082 = vld [vmem:[#allocation3 + $0x30] sm:$0xff]
      %v1083 = vld [vmem:[#allocation3 + $0x48] sm:$0xff]
      %v1084 = vld [vmem:[#allocation3 + $0x50] sm:$0xff]
      %v1085 = vld [vmem:[#allocation3 + $0x68] sm:$0xff]
      %v1086 = vld [vmem:[#allocation3 + $0x70] sm:$0xff]
      %v1087 = vld [vmem:[#allocation3 + $0x88] sm:$0xff]
      %v1088 = vld [vmem:[#allocation3 + $0x90] sm:$0xff]
      %v1089 = vld [vmem:[#allocation3 + $0xa8] sm:$0xff]
      %v1090 = vld [vmem:[#allocation3 + $0xb0] sm:$0xff]
      %v1091 = vld [vmem:[#allocation3 + $0xc8] sm:$0xff]
      %v1092 = vld [vmem:[#allocation3 + $0xd0] sm:$0xff]
      %v1093 = vld [vmem:[#allocation3 + $0xe8] sm:$0xff]
      %v1094 = vld [vmem:[#allocation3 + $0xf0] sm:$0xff]
      %v1095 = vld [vmem:[#allocation3 + $0x108] sm:$0xff]
      %v1096 = vld [vmem:[#allocation3 + $0x110] sm:$0xff]
      %v1097 = vld [vmem:[%s6] sm:$0xff]
      %1099 = vset.pattern.permute.xlu0 0
      %1100 = vperm.xlu0 %1099, %v1097
      %v1101 = vpop.permute.xlu0 %1100
      %vm1103 = vcmask 588800
      %v1105 = vsel %vm1103, %v1078, 0
      %1107 = vmatprep.subr.mxu0 0.0
      %1108 = vmatpush1.msra.mxu0 0.0
      %1109 = vmatprep.subr.mxu0 0.0
      %1110 = vmatpush1.msra.mxu0 0.0
      %1111 = vmatprep.subr.mxu0 0.0
      %1112 = vmatpush1.msra.mxu0 0.0
      %1113 = vmatprep.subr.mxu0 0.0
      %1114 = vmatpush1.msra.mxu0 0.0
      %1115 = vmatprep.subr.mxu0 0.0
      %1116 = vmatpush1.msra.mxu0 0.0
      %1117 = vmatprep.subr.mxu0 0.0
      %1118 = vmatpush1.msra.mxu0 0.0
      %1119 = vmatprep.subr.mxu0 0.0
      %1120 = vmatpush1.msra.mxu0 0.0
      %1121 = vmatprep.subr.mxu0 %v1096
      %1122 = vmatpush1.msra.mxu0 %v1095
      %1123 = vmatprep.subr.mxu0 %v1094
      %1124 = vmatpush1.msra.mxu0 %v1093
      %1125 = vmatprep.subr.mxu0 %v1092
      %1126 = vmatpush1.msra.mxu0 %v1091
      %1127 = vmatprep.subr.mxu0 %v1090
      %1128 = vmatpush1.msra.mxu0 %v1089
      %1129 = vmatprep.subr.mxu0 %v1088
      %1130 = vmatpush1.msra.mxu0 %v1087
      %1131 = vmatprep.subr.mxu0 %v1086
      %1132 = vmatpush1.msra.mxu0 %v1085
      %1133 = vmatprep.subr.mxu0 %v1084
      %1134 = vmatpush1.msra.mxu0 %v1083
      %1135 = vmatprep.subr.mxu0 %v1082
      %1136 = vmatpush1.msra.mxu0 %v1081
      %1137 = vmatprep.subr.mxu0 %v1080
      %1138 = vmatpush1.msra.mxu0 %v1079
      %1139 = vmatprep.subr.mxu0 0.0
      %1140 = vmatpush2.msra.mxu0 0.0
      %1141 = vmatprep.subr.mxu0 0.0
      %1142 = vmatpush2.msra.mxu0 0.0
      %1143 = vmatprep.subr.mxu0 0.0
      %1144 = vmatpush2.msra.mxu0 0.0
      %1145 = vmatprep.subr.mxu0 0.0
      %1146 = vmatpush2.msra.mxu0 0.0
      %1147 = vmatprep.subr.mxu0 0.0
      %1148 = vmatpush2.msra.mxu0 0.0
      %1149 = vmatprep.subr.mxu0 0.0
      %1150 = vmatpush2.msra.mxu0 0.0
      %1151 = vmatprep.subr.mxu0 0.0
      %1152 = vmatpush2.msra.mxu0 0.0
      %1153 = vmatprep.subr.mxu0 0.0
      %1154 = vmatpush2.msra.mxu0 0.0
      %1155 = vmatprep.subr.mxu0 0.0
      %1156 = vmatpush2.msra.mxu0 0.0
      %1157 = vmatprep.subr.mxu0 0.0
      %1158 = vmatpush2.msra.mxu0 0.0
      %1159 = vmatprep.subr.mxu0 0.0
      %1160 = vmatpush2.msra.mxu0 0.0
      %1161 = vmatprep.subr.mxu0 0.0
      %1162 = vmatpush2.msra.mxu0 0.0
      %1163 = vmatprep.subr.mxu0 0.0
      %1164 = vmatpush2.msra.mxu0 0.0
      %1165 = vmatprep.subr.mxu0 0.0
      %1166 = vmatpush2.msra.mxu0 0.0
      %1167 = vmatprep.subr.mxu0 0.0
      %1168 = vmatpush2.msra.mxu0 0.0
      %1169 = vmatprep.subr.mxu0 0.0
      %1170 = vmatpush2.msra.mxu0 0.0
      %1171 = vmatprep.mubr.f32.mxu0 0.0
      %1172 = vmatmul.mubr.f32.gmra.mxu0 %v1105
      %v1173 = vpop.f32.mrf.mxu0
      %v1174 = vadd.f32 %v1101, %v1173
      %v1175 = vpop.f32.mrf.mxu0
      %v1176 = vadd.f32 %v1101, %v1175
      %1177 = vdwg.mxu0
      %v1178 = vmax.f32 %v1174, 0.0
      %v1179 = vmax.f32 %v1176, 0.0
      %1180 = vst [vmem:[%s440 + $0x10] sm:$0xff] %v1178
      %1181 = vst [vmem:[%s440 + $0x18] sm:$0xff] %v1179
      %v1182 = vld [vmem:[%s7] sm:$0xff]
      %v1183 = vld [vmem:[%s7 + $0x8] sm:$0xff]
      %v1184 = vld [vmem:[%s440] sm:$0xff]
      %v1185 = vld [vmem:[%s440 + $0x8] sm:$0xff]
      %v1186 = vld [vmem:[%s440 + $0x10] sm:$0xff]
      %v1187 = vld [vmem:[%s440 + $0x18] sm:$0xff]
      %v1188 = vld [vmem:[%s8] sm:$0xff]
      %v1189 = vld [vmem:[%s8 + $0x8] sm:$0xff]
      %1191 = vset.pattern.permute.xlu0 0
      %1192 = vperm.xlu0 %1191, %v1188
      %v1193 = vpop.permute.xlu0 %1192
      %1196 = vset.pattern.permute.xlu0 0
      %1197 = vperm.xlu0 %1196, %v1189
      %v1198 = vpop.permute.xlu0 %1197
      %v1201 = vsel %vm691, %v1182, 0
      %v1204 = vsel %vm691, %v1183, 0
      %1206 = vmatprep.subr.mxu0 0.0
      %1207 = vmatpush1.msra.mxu0 0.0
      %1208 = vmatprep.subr.mxu0 0.0
      %1209 = vmatpush1.msra.mxu0 0.0
      %1210 = vmatprep.subr.mxu0 0.0
      %1211 = vmatpush1.msra.mxu0 0.0
      %1212 = vmatprep.subr.mxu0 0.0
      %1213 = vmatpush1.msra.mxu0 0.0
      %1214 = vmatprep.subr.mxu0 0.0
      %1215 = vmatpush1.msra.mxu0 0.0
      %1216 = vmatprep.subr.mxu0 0.0
      %1217 = vmatpush1.msra.mxu0 0.0
      %1218 = vmatprep.subr.mxu0 0.0
      %1219 = vmatpush1.msra.mxu0 0.0
      %1220 = vmatprep.subr.mxu0 0.0
      %1221 = vmatpush1.msra.mxu0 0.0
      %1222 = vmatprep.subr.mxu0 0.0
      %1223 = vmatpush1.msra.mxu0 0.0
      %1224 = vmatprep.subr.mxu0 0.0
      %1225 = vmatpush1.msra.mxu0 0.0
      %1226 = vmatprep.subr.mxu0 0.0
      %1227 = vmatpush1.msra.mxu0 0.0
      %1228 = vmatprep.subr.mxu0 0.0
      %1229 = vmatpush1.msra.mxu0 0.0
      %1230 = vmatprep.subr.mxu0 0.0
      %1231 = vmatpush1.msra.mxu0 0.0
      %1232 = vmatprep.subr.mxu0 0.0
      %1233 = vmatpush1.msra.mxu0 0.0
      %1234 = vmatprep.subr.mxu0 %v1187
      %1235 = vmatpush1.msra.mxu0 %v1186
      %1236 = vmatprep.subr.mxu0 %v1185
      %1237 = vmatpush1.msra.mxu0 %v1184
      %1238 = vmatprep.subr.mxu0 0.0
      %1239 = vmatpush2.msra.mxu0 0.0
      %1240 = vmatprep.subr.mxu0 0.0
      %1241 = vmatpush2.msra.mxu0 0.0
      %1242 = vmatprep.subr.mxu0 0.0
      %1243 = vmatpush2.msra.mxu0 0.0
      %1244 = vmatprep.subr.mxu0 0.0
      %1245 = vmatpush2.msra.mxu0 0.0
      %1246 = vmatprep.subr.mxu0 0.0
      %1247 = vmatpush2.msra.mxu0 0.0
      %1248 = vmatprep.subr.mxu0 0.0
      %1249 = vmatpush2.msra.mxu0 0.0
      %1250 = vmatprep.subr.mxu0 0.0
      %1251 = vmatpush2.msra.mxu0 0.0
      %1252 = vmatprep.subr.mxu0 0.0
      %1253 = vmatpush2.msra.mxu0 0.0
      %1254 = vmatprep.subr.mxu0 0.0
      %1255 = vmatpush2.msra.mxu0 0.0
      %1256 = vmatprep.subr.mxu0 0.0
      %1257 = vmatpush2.msra.mxu0 0.0
      %1258 = vmatprep.subr.mxu0 0.0
      %1259 = vmatpush2.msra.mxu0 0.0
      %1260 = vmatprep.subr.mxu0 0.0
      %1261 = vmatpush2.msra.mxu0 0.0
      %1262 = vmatprep.subr.mxu0 0.0
      %1263 = vmatpush2.msra.mxu0 0.0
      %1264 = vmatprep.subr.mxu0 0.0
      %1265 = vmatpush2.msra.mxu0 0.0
      %1266 = vmatprep.subr.mxu0 0.0
      %1267 = vmatpush2.msra.mxu0 0.0
      %1268 = vmatprep.subr.mxu0 0.0
      %1269 = vmatpush2.msra.mxu0 0.0
      %1270 = vmatprep.mubr.f32.mxu0 0.0
      %1271 = vmatmul.mubr.f32.gmra.mxu0 %v1201
      %v1272 = vpop.f32.mrf.mxu0
      %v1273 = vadd.f32 %v1193, %v1272
      %v1274 = vpop.f32.mrf.mxu0
      %v1275 = vadd.f32 %v1193, %v1274
      %1276 = vmatprep.mubr.f32.mxu0 0.0
      %1277 = vmatmul.mubr.f32.gmra.mxu0 %v1204
      %v1278 = vpop.f32.mrf.mxu0
      %v1279 = vadd.f32 %v1198, %v1278
      %v1280 = vpop.f32.mrf.mxu0
      %v1281 = vadd.f32 %v1198, %v1280
      %1282 = vdwg.mxu0
      %v1283 = vmax.f32 %v1273, 0.0
      %v1284 = vmax.f32 %v1275, 0.0
      %v1285 = vmax.f32 %v1279, 0.0
      %v1286 = vmax.f32 %v1281, 0.0
      %v1287 = vsel %vm638, %v1283, 0.0
      %v1288 = vsel %vm639, %v1284, 0.0
      %v1289 = vsel %vm638, %v1285, 0.0
      %v1290 = vsel %vm639, %v1286, 0.0
      %v1291 = vsel %vm646, %v1283, 0.0
      %v1292 = vsel %vm647, %v1284, 0.0
      %v1293 = vsel %vm646, %v1285, 0.0
      %v1294 = vsel %vm647, %v1286, 0.0
      %1299 = vrot.lane.b32.xlu0 %v1287, 17
      %v1300 = vpop.permute.xlu0 %1299
      %1301 = vrot.lane.b32.xlu0 %v1288, 17
      %v1302 = vpop.permute.xlu0 %1301
      %1303 = vrot.lane.b32.xlu0 %v1289, 17
      %v1304 = vpop.permute.xlu0 %1303
      %1305 = vrot.lane.b32.xlu0 %v1290, 17
      %v1306 = vpop.permute.xlu0 %1305
      %v1307 = vsel %vm472, %v1300, %v1302
      %v1308 = vsel %vm472, %v1304, %v1306
      %1315 = vst.msk [vmem:[#allocation2 + $0x8] sm:$0xff] %vm672, %v1300
      %1316 = vst [vmem:[#allocation2 + $0x10] sm:$0xff] %v1307
      %1317 = vst.msk [vmem:[#allocation2 + $0x18] sm:$0xff] %vm472, %v1302
      %1318 = vst.msk [vmem:[#allocation2 + $0x28] sm:$0xff] %vm672, %v1304
      %1319 = vst [vmem:[#allocation2 + $0x30] sm:$0xff] %v1308
      %1320 = vst.msk [vmem:[#allocation2 + $0x38] sm:$0xff] %vm472, %v1306
      %1325 = vrot.lane.b32.xlu0 %v1283, 16
      %v1326 = vpop.permute.xlu0 %1325
      %1327 = vrot.lane.b32.xlu0 %v1284, 16
      %v1328 = vpop.permute.xlu0 %1327
      %1329 = vrot.lane.b32.xlu0 %v1285, 16
      %v1330 = vpop.permute.xlu0 %1329
      %1331 = vrot.lane.b32.xlu0 %v1286, 16
      %v1332 = vpop.permute.xlu0 %1331
      %v1333 = vsel %vm691, %v1326, %v1328
      %v1334 = vsel %vm691, %v1330, %v1332
      %1341 = vst.msk [vmem:[#allocation2 + $0x48] sm:$0xff] %vm700, %v1326
      %1342 = vst [vmem:[#allocation2 + $0x50] sm:$0xff] %v1333
      %1343 = vst.msk [vmem:[#allocation2 + $0x58] sm:$0xff] %vm691, %v1328
      %1344 = vst.msk [vmem:[#allocation2 + $0x68] sm:$0xff] %vm700, %v1330
      %1345 = vst [vmem:[#allocation2 + $0x70] sm:$0xff] %v1334
      %1346 = vst.msk [vmem:[#allocation2 + $0x78] sm:$0xff] %vm691, %v1332
      %1351 = vrot.lane.b32.xlu0 %v1291, 15
      %v1352 = vpop.permute.xlu0 %1351
      %1353 = vrot.lane.b32.xlu0 %v1292, 15
      %v1354 = vpop.permute.xlu0 %1353
      %1355 = vrot.lane.b32.xlu0 %v1293, 15
      %v1356 = vpop.permute.xlu0 %1355
      %1357 = vrot.lane.b32.xlu0 %v1294, 15
      %v1358 = vpop.permute.xlu0 %1357
      %v1359 = vsel %vm719, %v1352, %v1354
      %v1360 = vsel %vm719, %v1356, %v1358
      %1367 = vst.msk [vmem:[#allocation2 + $0x88] sm:$0xff] %vm728, %v1352
      %1368 = vst [vmem:[#allocation2 + $0x90] sm:$0xff] %v1359
      %1369 = vst.msk [vmem:[#allocation2 + $0x98] sm:$0xff] %vm719, %v1354
      %1370 = vst.msk [vmem:[#allocation2 + $0xa8] sm:$0xff] %vm728, %v1356
      %1371 = vst [vmem:[#allocation2 + $0xb0] sm:$0xff] %v1360
      %1372 = vst.msk [vmem:[#allocation2 + $0xb8] sm:$0xff] %vm719, %v1358
      %1373 = vrot.lane.b32.xlu0 %v1287, 1
      %v1374 = vpop.permute.xlu0 %1373
      %1375 = vrot.lane.b32.xlu0 %v1288, 1
      %v1376 = vpop.permute.xlu0 %1375
      %1377 = vrot.lane.b32.xlu0 %v1289, 1
      %v1378 = vpop.permute.xlu0 %1377
      %1379 = vrot.lane.b32.xlu0 %v1290, 1
      %v1380 = vpop.permute.xlu0 %1379
      %v1381 = vsel %vm743, %v1374, %v1376
      %v1382 = vsel %vm743, %v1378, %v1380
      %1389 = vst.msk [vmem:[#allocation2 + $0xc8] sm:$0xff] %vm752, %v1374
      %1390 = vst [vmem:[#allocation2 + $0xd0] sm:$0xff] %v1381
      %1391 = vst.msk [vmem:[#allocation2 + $0xd8] sm:$0xff] %vm743, %v1376
      %1392 = vst.msk [vmem:[#allocation2 + $0xe8] sm:$0xff] %vm752, %v1378
      %1393 = vst [vmem:[#allocation2 + $0xf0] sm:$0xff] %v1382
      %1394 = vst.msk [vmem:[#allocation2 + $0xf8] sm:$0xff] %vm743, %v1380
      %1395 = vst [vmem:[#allocation2 + $0x108] sm:$0xff] %v1283
      %1396 = vst [vmem:[#allocation2 + $0x110] sm:$0xff] %v1284
      %1397 = vst [vmem:[#allocation2 + $0x128] sm:$0xff] %v1285
      %1398 = vst [vmem:[#allocation2 + $0x130] sm:$0xff] %v1286
      %1399 = vrot.lane.b32.xlu0 %v1291, 127
      %v1400 = vpop.permute.xlu0 %1399
      %1401 = vrot.lane.b32.xlu0 %v1292, 127
      %v1402 = vpop.permute.xlu0 %1401
      %1403 = vrot.lane.b32.xlu0 %v1293, 127
      %v1404 = vpop.permute.xlu0 %1403
      %1405 = vrot.lane.b32.xlu0 %v1294, 127
      %v1406 = vpop.permute.xlu0 %1405
      %v1407 = vsel %vm771, %v1400, %v1402
      %v1408 = vsel %vm771, %v1404, %v1406
      %1415 = vst.msk [vmem:[#allocation2 + $0x140] sm:$0xff] %vm780, %v1400
      %1416 = vst [vmem:[#allocation2 + $0x148] sm:$0xff] %v1407
      %1417 = vst.msk [vmem:[#allocation2 + $0x150] sm:$0xff] %vm771, %v1402
      %1418 = vst.msk [vmem:[#allocation2 + $0x160] sm:$0xff] %vm780, %v1404
      %1419 = vst [vmem:[#allocation2 + $0x168] sm:$0xff] %v1408
      %1420 = vst.msk [vmem:[#allocation2 + $0x170] sm:$0xff] %vm771, %v1406
      %1421 = vrot.lane.b32.xlu0 %v1287, 113
      %v1422 = vpop.permute.xlu0 %1421
      %1423 = vrot.lane.b32.xlu0 %v1288, 113
      %v1424 = vpop.permute.xlu0 %1423
      %1425 = vrot.lane.b32.xlu0 %v1289, 113
      %v1426 = vpop.permute.xlu0 %1425
      %1427 = vrot.lane.b32.xlu0 %v1290, 113
      %v1428 = vpop.permute.xlu0 %1427
      %v1429 = vsel %vm795, %v1422, %v1424
      %v1430 = vsel %vm795, %v1426, %v1428
      %1437 = vst.msk [vmem:[#allocation2 + $0x180] sm:$0xff] %vm804, %v1422
      %1438 = vst [vmem:[#allocation2 + $0x188] sm:$0xff] %v1429
      %1439 = vst.msk [vmem:[#allocation2 + $0x190] sm:$0xff] %vm795, %v1424
      %1440 = vst.msk [vmem:[#allocation2 + $0x1a0] sm:$0xff] %vm804, %v1426
      %1441 = vst [vmem:[#allocation2 + $0x1a8] sm:$0xff] %v1430
      %1442 = vst.msk [vmem:[#allocation2 + $0x1b0] sm:$0xff] %vm795, %v1428
      %1443 = vrot.lane.b32.xlu0 %v1283, 112
      %v1444 = vpop.permute.xlu0 %1443
      %1445 = vrot.lane.b32.xlu0 %v1284, 112
      %v1446 = vpop.permute.xlu0 %1445
      %1447 = vrot.lane.b32.xlu0 %v1285, 112
      %v1448 = vpop.permute.xlu0 %1447
      %1449 = vrot.lane.b32.xlu0 %v1286, 112
      %v1450 = vpop.permute.xlu0 %1449
      %v1451 = vsel %vm819, %v1444, %v1446
      %v1452 = vsel %vm819, %v1448, %v1450
      %1459 = vst.msk [vmem:[#allocation2 + $0x1c0] sm:$0xff] %vm828, %v1444
      %1460 = vst [vmem:[#allocation2 + $0x1c8] sm:$0xff] %v1451
      %1461 = vst.msk [vmem:[#allocation2 + $0x1d0] sm:$0xff] %vm819, %v1446
      %1462 = vst.msk [vmem:[#allocation2 + $0x1e0] sm:$0xff] %vm828, %v1448
      %1463 = vst [vmem:[#allocation2 + $0x1e8] sm:$0xff] %v1452
      %1464 = vst.msk [vmem:[#allocation2 + $0x1f0] sm:$0xff] %vm819, %v1450
      %1465 = vrot.lane.b32.xlu0 %v1291, 111
      %v1466 = vpop.permute.xlu0 %1465
      %1467 = vrot.lane.b32.xlu0 %v1292, 111
      %v1468 = vpop.permute.xlu0 %1467
      %1469 = vrot.lane.b32.xlu0 %v1293, 111
      %v1470 = vpop.permute.xlu0 %1469
      %1471 = vrot.lane.b32.xlu0 %v1294, 111
      %v1472 = vpop.permute.xlu0 %1471
      %v1473 = vsel %vm843, %v1466, %v1468
      %v1474 = vsel %vm843, %v1470, %v1472
      %1481 = vst.msk [vmem:[#allocation2 + $0x200] sm:$0xff] %vm491, %v1466
      %1482 = vst [vmem:[#allocation2 + $0x208] sm:$0xff] %v1473
      %1483 = vst.msk [vmem:[#allocation2 + $0x210] sm:$0xff] %vm843, %v1468
      %1484 = vst.msk [vmem:[#allocation2 + $0x220] sm:$0xff] %vm491, %v1470
      %1485 = vst [vmem:[#allocation2 + $0x228] sm:$0xff] %v1474
      %1486 = vst.msk [vmem:[#allocation2 + $0x230] sm:$0xff] %vm843, %v1472
      %v1487 = vld [vmem:[%s9] sm:$0xff]
      %v1488 = vld [vmem:[%s9 + $0x8] sm:$0xff]
      %v1489 = vld [vmem:[#allocation2 + $0x8] sm:$0xff]
      %v1490 = vld [vmem:[#allocation2 + $0x10] sm:$0xff]
      %v1491 = vld [vmem:[#allocation2 + $0x28] sm:$0xff]
      %v1492 = vld [vmem:[#allocation2 + $0x30] sm:$0xff]
      %v1493 = vld [vmem:[#allocation2 + $0x48] sm:$0xff]
      %v1494 = vld [vmem:[#allocation2 + $0x50] sm:$0xff]
      %v1495 = vld [vmem:[#allocation2 + $0x68] sm:$0xff]
      %v1496 = vld [vmem:[#allocation2 + $0x70] sm:$0xff]
      %v1497 = vld [vmem:[#allocation2 + $0x88] sm:$0xff]
      %v1498 = vld [vmem:[#allocation2 + $0x90] sm:$0xff]
      %v1499 = vld [vmem:[#allocation2 + $0xa8] sm:$0xff]
      %v1500 = vld [vmem:[#allocation2 + $0xb0] sm:$0xff]
      %v1501 = vld [vmem:[#allocation2 + $0xc8] sm:$0xff]
      %v1502 = vld [vmem:[#allocation2 + $0xd0] sm:$0xff]
      %v1503 = vld [vmem:[#allocation2 + $0xe8] sm:$0xff]
      %v1504 = vld [vmem:[#allocation2 + $0xf0] sm:$0xff]
      %v1505 = vld [vmem:[#allocation2 + $0x108] sm:$0xff]
      %v1506 = vld [vmem:[#allocation2 + $0x110] sm:$0xff]
      %v1507 = vld [vmem:[#allocation2 + $0x128] sm:$0xff]
      %v1508 = vld [vmem:[#allocation2 + $0x130] sm:$0xff]
      %v1509 = vld [vmem:[#allocation2 + $0x148] sm:$0xff]
      %v1510 = vld [vmem:[#allocation2 + $0x150] sm:$0xff]
      %v1511 = vld [vmem:[#allocation2 + $0x168] sm:$0xff]
      %v1512 = vld [vmem:[#allocation2 + $0x170] sm:$0xff]
      %v1513 = vld [vmem:[#allocation2 + $0x188] sm:$0xff]
      %v1514 = vld [vmem:[#allocation2 + $0x190] sm:$0xff]
      %v1515 = vld [vmem:[#allocation2 + $0x1a8] sm:$0xff]
      %v1516 = vld [vmem:[#allocation2 + $0x1b0] sm:$0xff]
      %v1517 = vld [vmem:[#allocation2 + $0x1c8] sm:$0xff]
      %v1518 = vld [vmem:[#allocation2 + $0x1d0] sm:$0xff]
      %v1519 = vld [vmem:[#allocation2 + $0x1e8] sm:$0xff]
      %v1520 = vld [vmem:[#allocation2 + $0x1f0] sm:$0xff]
      %v1521 = vld [vmem:[#allocation2 + $0x208] sm:$0xff]
      %v1522 = vld [vmem:[#allocation2 + $0x210] sm:$0xff]
      %v1523 = vld [vmem:[#allocation2 + $0x228] sm:$0xff]
      %v1524 = vld [vmem:[#allocation2 + $0x230] sm:$0xff]
      %v1525 = vld [vmem:[%s10] sm:$0xff]
      %1527 = vset.pattern.permute.xlu0 0
      %1528 = vperm.xlu0 %1527, %v1525
      %v1529 = vpop.permute.xlu0 %1528
      %v1532 = vsel %vm691, %v1488, 0
      %1534 = vmatprep.subr.mxu0 %v1520
      %1535 = vmatpush1.msra.mxu0 %v1519
      %1536 = vmatprep.subr.mxu0 %v1518
      %1537 = vmatpush1.msra.mxu0 %v1517
      %1538 = vmatprep.subr.mxu0 %v1516
      %1539 = vmatpush1.msra.mxu0 %v1515
      %1540 = vmatprep.subr.mxu0 %v1514
      %1541 = vmatpush1.msra.mxu0 %v1513
      %1542 = vmatprep.subr.mxu0 %v1512
      %1543 = vmatpush1.msra.mxu0 %v1511
      %1544 = vmatprep.subr.mxu0 %v1510
      %1545 = vmatpush1.msra.mxu0 %v1509
      %1546 = vmatprep.subr.mxu0 %v1508
      %1547 = vmatpush1.msra.mxu0 %v1507
      %1548 = vmatprep.subr.mxu0 %v1506
      %1549 = vmatpush1.msra.mxu0 %v1505
      %1550 = vmatprep.subr.mxu0 %v1504
      %1551 = vmatpush1.msra.mxu0 %v1503
      %1552 = vmatprep.subr.mxu0 %v1502
      %1553 = vmatpush1.msra.mxu0 %v1501
      %1554 = vmatprep.subr.mxu0 %v1500
      %1555 = vmatpush1.msra.mxu0 %v1499
      %1556 = vmatprep.subr.mxu0 %v1498
      %1557 = vmatpush1.msra.mxu0 %v1497
      %1558 = vmatprep.subr.mxu0 %v1496
      %1559 = vmatpush1.msra.mxu0 %v1495
      %1560 = vmatprep.subr.mxu0 %v1494
      %1561 = vmatpush1.msra.mxu0 %v1493
      %1562 = vmatprep.subr.mxu0 %v1492
      %1563 = vmatpush1.msra.mxu0 %v1491
      %1564 = vmatprep.subr.mxu0 %v1490
      %1565 = vmatpush1.msra.mxu0 %v1489
      %1566 = vmatprep.subr.mxu0 0.0
      %1567 = vmatpush2.msra.mxu0 0.0
      %1568 = vmatprep.subr.mxu0 0.0
      %1569 = vmatpush2.msra.mxu0 0.0
      %1570 = vmatprep.subr.mxu0 0.0
      %1571 = vmatpush2.msra.mxu0 0.0
      %1572 = vmatprep.subr.mxu0 0.0
      %1573 = vmatpush2.msra.mxu0 0.0
      %1574 = vmatprep.subr.mxu0 0.0
      %1575 = vmatpush2.msra.mxu0 0.0
      %1576 = vmatprep.subr.mxu0 0.0
      %1577 = vmatpush2.msra.mxu0 0.0
      %1578 = vmatprep.subr.mxu0 0.0
      %1579 = vmatpush2.msra.mxu0 0.0
      %1580 = vmatprep.subr.mxu0 0.0
      %1581 = vmatpush2.msra.mxu0 0.0
      %1582 = vmatprep.subr.mxu0 0.0
      %1583 = vmatpush2.msra.mxu0 0.0
      %1584 = vmatprep.subr.mxu0 0.0
      %1585 = vmatpush2.msra.mxu0 0.0
      %1586 = vmatprep.subr.mxu0 0.0
      %1587 = vmatpush2.msra.mxu0 0.0
      %1588 = vmatprep.subr.mxu0 0.0
      %1589 = vmatpush2.msra.mxu0 0.0
      %1590 = vmatprep.subr.mxu0 0.0
      %1591 = vmatpush2.msra.mxu0 0.0
      %1592 = vmatprep.subr.mxu0 0.0
      %1593 = vmatpush2.msra.mxu0 0.0
      %1594 = vmatprep.subr.mxu0 %v1524
      %1595 = vmatpush2.msra.mxu0 %v1523
      %1596 = vmatprep.subr.mxu0 %v1522
      %1597 = vmatpush2.msra.mxu0 %v1521
      %1598 = vmatprep.mubr.f32.mxu0 %v1532
      %1599 = vmatmul.mubr.f32.gmra.mxu0 %v1487
      %v1600 = vpop.f32.mrf.mxu0
      %v1601 = vadd.f32 %v1529, %v1600
      %v1602 = vpop.f32.mrf.mxu0
      %v1603 = vadd.f32 %v1529, %v1602
      %1604 = vdwg.mxu0
      %v1605 = vmax.f32 %v1601, 0.0
      %v1606 = vmax.f32 %v1603, 0.0
      %v1607 = vsel %vm638, %v1605, 0.0
      %v1608 = vsel %vm639, %v1606, 0.0
      %v1609 = vsel %vm646, %v1605, 0.0
      %v1610 = vsel %vm647, %v1606, 0.0
      %1613 = vrot.lane.b32.xlu0 %v1607, 17
      %v1614 = vpop.permute.xlu0 %1613
      %1615 = vrot.lane.b32.xlu0 %v1608, 17
      %v1616 = vpop.permute.xlu0 %1615
      %v1617 = vsel %vm472, %v1614, %v1616
      %1621 = vst.msk [vmem:[#allocation3 + $0x8] sm:$0xff] %vm672, %v1614
      %1622 = vst [vmem:[#allocation3 + $0x10] sm:$0xff] %v1617
      %1623 = vst.msk [vmem:[#allocation3 + $0x18] sm:$0xff] %vm472, %v1616
      %1626 = vrot.lane.b32.xlu0 %v1605, 16
      %v1627 = vpop.permute.xlu0 %1626
      %1628 = vrot.lane.b32.xlu0 %v1606, 16
      %v1629 = vpop.permute.xlu0 %1628
      %v1630 = vsel %vm691, %v1627, %v1629
      %1634 = vst.msk [vmem:[#allocation3 + $0x28] sm:$0xff] %vm700, %v1627
      %1635 = vst [vmem:[#allocation3 + $0x30] sm:$0xff] %v1630
      %1636 = vst.msk [vmem:[#allocation3 + $0x38] sm:$0xff] %vm691, %v1629
      %1639 = vrot.lane.b32.xlu0 %v1609, 15
      %v1640 = vpop.permute.xlu0 %1639
      %1641 = vrot.lane.b32.xlu0 %v1610, 15
      %v1642 = vpop.permute.xlu0 %1641
      %v1643 = vsel %vm719, %v1640, %v1642
      %1647 = vst.msk [vmem:[#allocation3 + $0x48] sm:$0xff] %vm728, %v1640
      %1648 = vst [vmem:[#allocation3 + $0x50] sm:$0xff] %v1643
      %1649 = vst.msk [vmem:[#allocation3 + $0x58] sm:$0xff] %vm719, %v1642
      %1650 = vrot.lane.b32.xlu0 %v1607, 1
      %v1651 = vpop.permute.xlu0 %1650
      %1652 = vrot.lane.b32.xlu0 %v1608, 1
      %v1653 = vpop.permute.xlu0 %1652
      %v1654 = vsel %vm743, %v1651, %v1653
      %1658 = vst.msk [vmem:[#allocation3 + $0x68] sm:$0xff] %vm752, %v1651
      %1659 = vst [vmem:[#allocation3 + $0x70] sm:$0xff] %v1654
      %1660 = vst.msk [vmem:[#allocation3 + $0x78] sm:$0xff] %vm743, %v1653
      %1661 = vst [vmem:[#allocation3 + $0x88] sm:$0xff] %v1605
      %1662 = vst [vmem:[#allocation3 + $0x90] sm:$0xff] %v1606
      %1663 = vrot.lane.b32.xlu0 %v1609, 127
      %v1664 = vpop.permute.xlu0 %1663
      %1665 = vrot.lane.b32.xlu0 %v1610, 127
      %v1666 = vpop.permute.xlu0 %1665
      %v1667 = vsel %vm771, %v1664, %v1666
      %1671 = vst.msk [vmem:[#allocation3 + $0xa0] sm:$0xff] %vm780, %v1664
      %1672 = vst [vmem:[#allocation3 + $0xa8] sm:$0xff] %v1667
      %1673 = vst.msk [vmem:[#allocation3 + $0xb0] sm:$0xff] %vm771, %v1666
      %1674 = vrot.lane.b32.xlu0 %v1607, 113
      %v1675 = vpop.permute.xlu0 %1674
      %1676 = vrot.lane.b32.xlu0 %v1608, 113
      %v1677 = vpop.permute.xlu0 %1676
      %v1678 = vsel %vm795, %v1675, %v1677
      %1682 = vst.msk [vmem:[#allocation3 + $0xc0] sm:$0xff] %vm804, %v1675
      %1683 = vst [vmem:[#allocation3 + $0xc8] sm:$0xff] %v1678
      %1684 = vst.msk [vmem:[#allocation3 + $0xd0] sm:$0xff] %vm795, %v1677
      %1685 = vrot.lane.b32.xlu0 %v1605, 112
      %v1686 = vpop.permute.xlu0 %1685
      %1687 = vrot.lane.b32.xlu0 %v1606, 112
      %v1688 = vpop.permute.xlu0 %1687
      %v1689 = vsel %vm819, %v1686, %v1688
      %1693 = vst.msk [vmem:[#allocation3 + $0xe0] sm:$0xff] %vm828, %v1686
      %1694 = vst [vmem:[#allocation3 + $0xe8] sm:$0xff] %v1689
      %1695 = vst.msk [vmem:[#allocation3 + $0xf0] sm:$0xff] %vm819, %v1688
      %1696 = vrot.lane.b32.xlu0 %v1609, 111
      %v1697 = vpop.permute.xlu0 %1696
      %1698 = vrot.lane.b32.xlu0 %v1610, 111
      %v1699 = vpop.permute.xlu0 %1698
      %v1700 = vsel %vm843, %v1697, %v1699
      %1704 = vst.msk [vmem:[#allocation3 + $0x100] sm:$0xff] %vm491, %v1697
      %1705 = vst [vmem:[#allocation3 + $0x108] sm:$0xff] %v1700
      %1706 = vst.msk [vmem:[#allocation3 + $0x110] sm:$0xff] %vm843, %v1699
      %v1707 = vld [vmem:[%s11] sm:$0xff]
      %v1708 = vld [vmem:[#allocation3 + $0x8] sm:$0xff]
      %v1709 = vld [vmem:[#allocation3 + $0x10] sm:$0xff]
      %v1710 = vld [vmem:[#allocation3 + $0x28] sm:$0xff]
      %v1711 = vld [vmem:[#allocation3 + $0x30] sm:$0xff]
      %v1712 = vld [vmem:[#allocation3 + $0x48] sm:$0xff]
      %v1713 = vld [vmem:[#allocation3 + $0x50] sm:$0xff]
      %v1714 = vld [vmem:[#allocation3 + $0x68] sm:$0xff]
      %v1715 = vld [vmem:[#allocation3 + $0x70] sm:$0xff]
      %v1716 = vld [vmem:[#allocation3 + $0x88] sm:$0xff]
      %v1717 = vld [vmem:[#allocation3 + $0x90] sm:$0xff]
      %v1718 = vld [vmem:[#allocation3 + $0xa8] sm:$0xff]
      %v1719 = vld [vmem:[#allocation3 + $0xb0] sm:$0xff]
      %v1720 = vld [vmem:[#allocation3 + $0xc8] sm:$0xff]
      %v1721 = vld [vmem:[#allocation3 + $0xd0] sm:$0xff]
      %v1722 = vld [vmem:[#allocation3 + $0xe8] sm:$0xff]
      %v1723 = vld [vmem:[#allocation3 + $0xf0] sm:$0xff]
      %v1724 = vld [vmem:[#allocation3 + $0x108] sm:$0xff]
      %v1725 = vld [vmem:[#allocation3 + $0x110] sm:$0xff]
      %v1726 = vld [vmem:[%s12] sm:$0xff]
      %1728 = vset.pattern.permute.xlu0 0
      %1729 = vperm.xlu0 %1728, %v1726
      %v1730 = vpop.permute.xlu0 %1729
      %v1733 = vsel %vm1103, %v1707, 0
      %1735 = vmatprep.subr.mxu0 0.0
      %1736 = vmatpush1.msra.mxu0 0.0
      %1737 = vmatprep.subr.mxu0 0.0
      %1738 = vmatpush1.msra.mxu0 0.0
      %1739 = vmatprep.subr.mxu0 0.0
      %1740 = vmatpush1.msra.mxu0 0.0
      %1741 = vmatprep.subr.mxu0 0.0
      %1742 = vmatpush1.msra.mxu0 0.0
      %1743 = vmatprep.subr.mxu0 0.0
      %1744 = vmatpush1.msra.mxu0 0.0
      %1745 = vmatprep.subr.mxu0 0.0
      %1746 = vmatpush1.msra.mxu0 0.0
      %1747 = vmatprep.subr.mxu0 0.0
      %1748 = vmatpush1.msra.mxu0 0.0
      %1749 = vmatprep.subr.mxu0 %v1725
      %1750 = vmatpush1.msra.mxu0 %v1724
      %1751 = vmatprep.subr.mxu0 %v1723
      %1752 = vmatpush1.msra.mxu0 %v1722
      %1753 = vmatprep.subr.mxu0 %v1721
      %1754 = vmatpush1.msra.mxu0 %v1720
      %1755 = vmatprep.subr.mxu0 %v1719
      %1756 = vmatpush1.msra.mxu0 %v1718
      %1757 = vmatprep.subr.mxu0 %v1717
      %1758 = vmatpush1.msra.mxu0 %v1716
      %1759 = vmatprep.subr.mxu0 %v1715
      %1760 = vmatpush1.msra.mxu0 %v1714
      %1761 = vmatprep.subr.mxu0 %v1713
      %1762 = vmatpush1.msra.mxu0 %v1712
      %1763 = vmatprep.subr.mxu0 %v1711
      %1764 = vmatpush1.msra.mxu0 %v1710
      %1765 = vmatprep.subr.mxu0 %v1709
      %1766 = vmatpush1.msra.mxu0 %v1708
      %1767 = vmatprep.subr.mxu0 0.0
      %1768 = vmatpush2.msra.mxu0 0.0
      %1769 = vmatprep.subr.mxu0 0.0
      %1770 = vmatpush2.msra.mxu0 0.0
      %1771 = vmatprep.subr.mxu0 0.0
      %1772 = vmatpush2.msra.mxu0 0.0
      %1773 = vmatprep.subr.mxu0 0.0
      %1774 = vmatpush2.msra.mxu0 0.0
      %1775 = vmatprep.subr.mxu0 0.0
      %1776 = vmatpush2.msra.mxu0 0.0
      %1777 = vmatprep.subr.mxu0 0.0
      %1778 = vmatpush2.msra.mxu0 0.0
      %1779 = vmatprep.subr.mxu0 0.0
      %1780 = vmatpush2.msra.mxu0 0.0
      %1781 = vmatprep.subr.mxu0 0.0
      %1782 = vmatpush2.msra.mxu0 0.0
      %1783 = vmatprep.subr.mxu0 0.0
      %1784 = vmatpush2.msra.mxu0 0.0
      %1785 = vmatprep.subr.mxu0 0.0
      %1786 = vmatpush2.msra.mxu0 0.0
      %1787 = vmatprep.subr.mxu0 0.0
      %1788 = vmatpush2.msra.mxu0 0.0
      %1789 = vmatprep.subr.mxu0 0.0
      %1790 = vmatpush2.msra.mxu0 0.0
      %1791 = vmatprep.subr.mxu0 0.0
      %1792 = vmatpush2.msra.mxu0 0.0
      %1793 = vmatprep.subr.mxu0 0.0
      %1794 = vmatpush2.msra.mxu0 0.0
      %1795 = vmatprep.subr.mxu0 0.0
      %1796 = vmatpush2.msra.mxu0 0.0
      %1797 = vmatprep.subr.mxu0 0.0
      %1798 = vmatpush2.msra.mxu0 0.0
      %1799 = vmatprep.mubr.f32.mxu0 0.0
      %1800 = vmatmul.mubr.f32.gmra.mxu0 %v1733
      %v1801 = vpop.f32.mrf.mxu0
      %v1802 = vadd.f32 %v1730, %v1801
      %v1803 = vpop.f32.mrf.mxu0
      %v1804 = vadd.f32 %v1730, %v1803
      %1805 = vdwg.mxu0
      %v1806 = vmax.f32 %v1802, 0.0
      %v1807 = vmax.f32 %v1804, 0.0
      %1808 = vst [vmem:[%s440 + $0x20] sm:$0xff] %v1806
      %1809 = vst [vmem:[%s440 + $0x28] sm:$0xff] %v1807
      %p1810 = scmp.lt.s32.totalorder %s24, 1
      %s1811 = scalar_select %p1810, %s24, 1
      %s1812 = smul.addr %s1811, 6
      %s1813 = smul.addr %s1812, 8
      %s1814 = scalar_lea.vmem %s13, %s1813
      // Predicated region
      $region73: #{dense_block_apply.1} parent=71 // pred_check
        %p1815 = pneg %p320
      $region74: #{dense_block_apply.1} parent=71 // pred_check_branch
        %1817 = sbr.rel (%p1815) target = $region76
      $region75: #{dense_block_apply.1} parent=71 // pred_region
        _
      $region76: #{dense_block_apply.1} parent=71 // pred_fallthru
        _
    $region72: #{dense_block_apply.1} parent=5 // pred_fallthru
      _
    %p1818 = scmp.le.s32.totalorder 2, %s19
    // Predicated region
    $region77: #{dense_block_apply.1} parent=5 // pred_check
      %p1819 = pneg %p1818
    $region78: #{dense_block_apply.1} parent=5 // pred_check_branch
      %1821 = sbr.rel (%p1819) target = $region80
    $region79: #{dense_block_apply.1} parent=5 // pred_region
      %s1822 = ssub.s32 %s19, 2
      // Predicated region
      $region81: #{dense_block_apply.1} parent=79 // pred_check
        %p1823 = pneg %p326
      $region82: #{dense_block_apply.1} parent=79 // pred_check_branch
        %1825 = sbr.rel (%p1823) target = $region84
      $region83: #{dense_block_apply.1} parent=79 // pred_region
        %p1826 = scmp.lt.s32.totalorder %s25, 1
        %s1827 = scalar_select %p1826, %s25, 1
        %s1828 = smul.addr %s1827, 6
        %s1829 = smul.addr %s1828, 8
        %s1830 = scalar_lea.vmem %s13, %s1829
      $region84: #{dense_block_apply.1} parent=79 // pred_fallthru
        _
    $region80: #{dense_block_apply.1} parent=5 // pred_fallthru
      _
  $region6: #{dense_block_apply.1} parent=0 // loop_footer
    %s23 = sadd.s32 1, %s19
  $region7: #{dense_block_apply.1} parent=0 // loop_footer_branch
    %18 = sbr.rel target = $region3
  $region8: #{dense_block_apply.1} parent=0 // loop_exit
    _

</llo_original>
